<compile_context>
chip_gen: v7x
topology: tpu7x:2x2x1
jax: 0.10.0
libtpu: 0.0.40
codegen_flags: <defaults>
</compile_context>

<pallas_src>
import jax
import jax.numpy as jnp
import numpy as np
from jax.experimental import pallas as pl
from jax.experimental.pallas import tpu as pltpu

TWO_PI = 2.0 * 3.141592653  # matches the PyTorch constant exactly


def _round_up(x, m):
    return ((x + m - 1) // m) * m


# --------------------------- static channel layout ---------------------------
C_PAD = 16                 # per-neighbor channel group width (9 real + 7 zero pad)
C1, C2, C3 = 16, 32, 64    # Merge MLP widths (scale = 2)
F1, F2 = 32, 32            # fc1 / fc2 widths

_RW1 = 0
_RW2 = _RW1 + C1           # 16
_RW3 = _RW2 + C2           # 48
_RF1 = _RW3 + C3           # 112
_RF2 = _RF1 + F1           # 144
_RWEND = _RF2 + F2         # 176   rows in the packed bf16 weight slab
_RB_W3 = _RWEND            # 176   fc3 weight column lives in the f32 slab (full precision)
_RB_B3 = _RB_W3 + F2       # 208
_BROWS = _round_up(_RB_B3 + 1, 8)  # 216 rows in the packed f32 bias slab


# ---------------------------------------------------------------------------
# Pallas kernel
# ---------------------------------------------------------------------------
def axisnet_kernel(feat_ref, geo_ref, wpack_ref, bpack_ref, out_ref):
    # feat_ref: (K*16, tm) bf16 ; geo_ref: (16, tm) f32
    # wpack_ref: (176, 64) bf16 ; bpack_ref: (216, 1) f32 ; out_ref: (8, tm) f32
    kc, tm = feat_ref.shape
    K = kc // C_PAD

    # packed weight slab (bf16) — static slices are free
    w1 = wpack_ref[_RW1:_RW1 + C1, 0:C_PAD]      # (16, 16)  cols 9..15 are zero
    w2 = wpack_ref[_RW2:_RW2 + C2, 0:C1]         # (32, 16)
    w3 = wpack_ref[_RW3:_RW3 + C3, 0:C2]         # (64, 32)
    wf1 = wpack_ref[_RF1:_RF1 + F1, 0:C3]        # (32, 64)
    wf2 = wpack_ref[_RF2:_RF2 + F2, 0:F1]        # (32, 32)

    # packed bias / fc3 slab (f32), all (C, 1) column vectors broadcast along lanes
    bm1 = bpack_ref[_RW1:_RW1 + C1, :]
    bm2 = bpack_ref[_RW2:_RW2 + C2, :]
    bm3 = bpack_ref[_RW3:_RW3 + C3, :]
    bf1 = bpack_ref[_RF1:_RF1 + F1, :]
    bf2 = bpack_ref[_RF2:_RF2 + F2, :]
    w3c = bpack_ref[_RB_W3:_RB_W3 + F2, :]       # fc3 weight column (32, 1), f32
    b3s = bpack_ref[_RB_B3:_RB_B3 + 1, :]        # fc3 bias (1, 1)

    # --- Merge: shared pointwise MLP [9->16->32->64] + ReLU, max-pooled over K ---
    # Short unrolled per-neighbor loop keeps the live set at ~(64, tm) (no K*tm-row
    # intermediate -> no spills); every dot is bf16 x bf16 with f32 accumulation.
    pooled = jnp.zeros((C3, tm), jnp.float32)    # ReLU >= 0, so zero-init == true max
    for k in range(K):
        xk = feat_ref[k * C_PAD:(k + 1) * C_PAD, :]                       # (16, tm) bf16
        h = jnp.dot(w1, xk, preferred_element_type=jnp.float32) + bm1
        h = jnp.maximum(h, 0.0).astype(jnp.bfloat16)
        h = jnp.dot(w2, h, preferred_element_type=jnp.float32) + bm2
        h = jnp.maximum(h, 0.0).astype(jnp.bfloat16)
        h = jnp.dot(w3, h, preferred_element_type=jnp.float32) + bm3
        pooled = jnp.maximum(pooled, jnp.maximum(h, 0.0))

    # --- fc1 / fc2 (ReLU) ; dropouts are identity in eval mode ---
    f = jnp.dot(wf1, pooled.astype(jnp.bfloat16),
                preferred_element_type=jnp.float32) + bf1
    f = jnp.maximum(f, 0.0).astype(jnp.bfloat16)
    f = jnp.dot(wf2, f, preferred_element_type=jnp.float32) + bf2
    f = jnp.maximum(f, 0.0)                                               # (32, tm) f32

    # --- fc3 (single output): VPU multiply + sublane reduction, no width-1 MXU pass ---
    ang = jnp.sum(f * w3c, axis=0, keepdims=True) + b3s                   # (1, tm)
    ang = jnp.tanh(ang) * TWO_PI
    c = jnp.cos(ang)
    s = jnp.sin(ang)

    # --- rotate local axes + cross product; every row is a full-lane-width store ---
    ax0 = geo_ref[0:3, :]
    ax1 = geo_ref[3:6, :]
    n = geo_ref[6:9, :]
    x_axis = c * ax0 + s * ax1                                            # (3, tm)
    out_ref[0:3, :] = x_axis
    out_ref[3:4, :] = n[1:2, :] * x_axis[2:3, :] - n[2:3, :] * x_axis[1:2, :]
    out_ref[4:5, :] = n[2:3, :] * x_axis[0:1, :] - n[0:1, :] * x_axis[2:3, :]
    out_ref[5:6, :] = n[0:1, :] * x_axis[1:2, :] - n[1:2, :] * x_axis[0:1, :]
    out_ref[6:8, :] = jnp.zeros((2, tm), jnp.float32)                     # deterministic pad


# ---------------------------------------------------------------------------
# pallas_call wrapper: lane-dense tiles, tail padding, grid >= 2 when possible
# ---------------------------------------------------------------------------
def axisnet_pallas(featT, geoT, wpack, bpack, M, K, tm_max=1024):
    KC, Mf = featT.shape
    assert KC == K * C_PAD and geoT.shape == (16, Mf)

    # Points live on the lane axis, so the tile width must be a multiple of 128.
    tm_cap = max(128, (int(tm_max) // 128) * 128)
    M_pad0 = _round_up(M, 128)
    if M_pad0 <= tm_cap and M_pad0 >= 256:
        # split into >= 2 tiles so both v7x TensorCores get work
        tm = _round_up(pl.cdiv(M_pad0, 2), 128)
    else:
        tm = min(tm_cap, M_pad0)
    M_pad = _round_up(M_pad0, tm)
    if M_pad != Mf:
        featT = jnp.pad(featT, ((0, 0), (0, M_pad - Mf)))
        geoT = jnp.pad(geoT, ((0, 0), (0, M_pad - Mf)))
    grid = (M_pad // tm,)

    in_specs = [
        pl.BlockSpec((KC, tm), lambda i: (0, i)),       # feat tile (lane-dense)
        pl.BlockSpec((16, tm), lambda i: (0, i)),       # geo tile (lane-dense)
        pl.BlockSpec(wpack.shape, lambda i: (0, 0)),    # weight slab: fetched once
        pl.BlockSpec(bpack.shape, lambda i: (0, 0)),    # bias slab:   fetched once
    ]
    out_specs = pl.BlockSpec((8, tm), lambda i: (0, i))
    out_shape = jax.ShapeDtypeStruct((8, M_pad), jnp.float32)

    param_bytes = (int(wpack.size) * wpack.dtype.itemsize
                   + int(bpack.size) * bpack.dtype.itemsize)
    block_bytes = KC * tm * 2 + 16 * tm * 4 + 8 * tm * 4
    # right-sized VMEM budget: double-buffered blocks + params + headroom
    vmem_limit = int(min(64 << 20, max(8 << 20, 6 * block_bytes + 4 * param_bytes)))

    flops = 2 * M * K * (9 * C1 + C1 * C2 + C2 * C3) + 2 * M * (C3 * F1 + F1 * F2 + F2)
    bytes_accessed = KC * M_pad * 2 + 16 * M_pad * 4 + 8 * M_pad * 4 + param_bytes
    cost = pl.CostEstimate(flops=int(flops), transcendentals=3 * M,
                           bytes_accessed=int(bytes_accessed))

    out = pl.pallas_call(
        axisnet_kernel,
        grid=grid,
        in_specs=in_specs,
        out_specs=out_specs,
        out_shape=out_shape,
        compiler_params=pltpu.CompilerParams(
            dimension_semantics=("parallel",),
            vmem_limit_bytes=vmem_limit),
        cost_estimate=cost,
    )(featT, geoT, wpack, bpack)
    return out


# ---------------------------------------------------------------------------
# Param packing: 12 weights/biases -> one bf16 slab + one f32 slab (pre-padded)
# ---------------------------------------------------------------------------
def pack_params(params):
    (wm1, bm1, wm2, bm2, wm3, bm3, w1, b1, w2, b2, w3, b3) = params
    # init gives (in, out); the kernel wants (out, in) for the transposed orientation.
    wpack = jnp.zeros((_RWEND, C3), jnp.float32)
    wpack = wpack.at[_RW1:_RW1 + C1, 0:9].set(wm1.T)
    wpack = wpack.at[_RW2:_RW2 + C2, 0:C1].set(wm2.T)
    wpack = wpack.at[_RW3:_RW3 + C3, 0:C2].set(wm3.T)
    wpack = wpack.at[_RF1:_RF1 + F1, 0:C3].set(w1.T)
    wpack = wpack.at[_RF2:_RF2 + F2, 0:F1].set(w2.T)
    wpack = wpack.astype(jnp.bfloat16)

    bpack = jnp.zeros((_BROWS, 1), jnp.float32)
    bpack = bpack.at[_RW1:_RW1 + C1, 0].set(bm1.reshape(-1))
    bpack = bpack.at[_RW2:_RW2 + C2, 0].set(bm2.reshape(-1))
    bpack = bpack.at[_RW3:_RW3 + C3, 0].set(bm3.reshape(-1))
    bpack = bpack.at[_RF1:_RF1 + F1, 0].set(b1.reshape(-1))
    bpack = bpack.at[_RF2:_RF2 + F2, 0].set(b2.reshape(-1))
    bpack = bpack.at[_RB_W3:_RB_W3 + F2, 0].set(w3.reshape(-1))   # fc3 weights (f32)
    bpack = bpack.at[_RB_B3, 0].set(b3.reshape(-1)[0])            # fc3 bias
    return wpack, bpack


# ---------------------------------------------------------------------------
# Glue: gather, local-axis transform, faithful torch scramble, lane-dense relayout
# ---------------------------------------------------------------------------
def axisnet_forward(xyz, neighbors, local_axis, params, tm_max=1024):
    B, N, _ = xyz.shape
    K = neighbors.shape[-1]
    normal = xyz[:, :, 3:]
    xyz3 = xyz[:, :, 0:3]

    # index_points: out[b, n, k, :] = points[b, neighbors[b, n, k], :]
    gather = jax.vmap(lambda p, i: p[i])
    grouped_xyz = gather(xyz3, neighbors)                 # (B, N, K, 3)
    grouped_normal = gather(normal, neighbors)            # (B, N, K, 3)

    local_xyz = jnp.matmul(grouped_xyz - xyz3[:, :, None, :], local_axis)
    grouped_normal_r = jnp.matmul(grouped_normal, local_axis)
    cat = jnp.concatenate([local_xyz, grouped_xyz, grouped_normal_r], axis=3)  # (B,N,K,9)
    M = B * N

    # Faithful reproduction of torch's `.permute(0,3,2,1).reshape(B*N, K, -1)` scramble;
    # cast to bf16 *before* the relayout (halves wrapper HBM traffic), then lay out
    # channels-major / point-minor so the kernel's dominant read is lane-dense.
    scr = jnp.transpose(cat.astype(jnp.bfloat16), (0, 3, 2, 1)).reshape(M, K, 9)
    featT = jnp.transpose(scr, (1, 2, 0))                                   # (K, 9, M)
    featT = jnp.pad(featT, ((0, 0), (0, C_PAD - 9), (0, 0))).reshape(K * C_PAD, M)

    geoT = jnp.concatenate(
        [local_axis[..., 0].reshape(M, 3).T,
         local_axis[..., 1].reshape(M, 3).T,
         normal.reshape(M, 3).T,
         jnp.zeros((7, M), jnp.float32)], axis=0).astype(jnp.float32)        # (16, M)

    wpack, bpack = pack_params(params)
    packed = axisnet_pallas(featT, geoT, wpack, bpack, M, K, tm_max)
    x_axis = packed[0:3, :M].T.reshape(B, N, 3)
    y_axis = packed[3:6, :M].T.reshape(B, N, 3)
    return x_axis, y_axis, normal


# ---------------------------------------------------------------------------
# Deterministic parameter init (synthetic; weight_norm folded here)
# ---------------------------------------------------------------------------
def init_params(key):
    ks = jax.random.split(key, 6)

    def linear_wn(k, in_dim, out_dim):
        kv, kg, kb = jax.random.split(k, 3)
        v = jax.random.normal(kv, (out_dim, in_dim), jnp.float32) * 0.1
        g = jax.random.uniform(kg, (out_dim, 1), jnp.float32, 0.5, 1.5)
        b = jax.random.normal(kb, (1, out_dim), jnp.float32) * 0.05
        w = g * v / (jnp.linalg.norm(v, axis=1, keepdims=True) + 1e-12)
        return w.T, b            # (in, out), (1, out)

    def pointwise(k, in_dim, out_dim):
        kw, kb = jax.random.split(k)
        w = jax.random.normal(kw, (out_dim, in_dim), jnp.float32) * 0.1
        b = jax.random.normal(kb, (1, out_dim), jnp.float32) * 0.05
        return w.T, b            # (in, out), (1, out)

    wm1, bm1 = pointwise(ks[0], 9, C1)       # Merge mlp[0]
    wm2, bm2 = pointwise(ks[1], C1, C2)      # Merge mlp[1]
    wm3, bm3 = pointwise(ks[2], C2, C3)      # Merge mlp[2]
    w1, b1 = linear_wn(ks[3], C3, F1)        # fc1
    w2, b2 = linear_wn(ks[4], F1, F2)        # fc2
    w3, b3 = linear_wn(ks[5], F2, 1)         # fc3 (normal=True -> 1 output)
    return (wm1, bm1, wm2, bm2, wm3, bm3, w1, b1, w2, b2, w3, b3)


# ---------------------------------------------------------------------------
# Plain-JAX reference of the in-kernel math (mirrors the kernel's bf16 cast points)
# ---------------------------------------------------------------------------
def reference_tail(feat_scr, ax0, ax1, nrm, params):
    (wm1, bm1, wm2, bm2, wm3, bm3, w1, b1, w2, b2, w3, b3) = params
    M, K, C = feat_scr.shape

    def q(a):
        return a.astype(jnp.bfloat16).astype(jnp.float32)

    x = q(feat_scr).reshape(M * K, C)
    h = jax.nn.relu(x @ q(wm1) + bm1)
    h = jax.nn.relu(q(h) @ q(wm2) + bm2)
    h = jax.nn.relu(q(h) @ q(wm3) + bm3)
    pooled = jnp.max(h.reshape(M, K, -1), axis=1)
    f = jax.nn.relu(q(pooled) @ q(w1) + b1)
    f = jax.nn.relu(q(f) @ q(w2) + b2)
    ang = jnp.tanh(f @ w3 + b3) * TWO_PI
    c, s = jnp.cos(ang), jnp.sin(ang)
    x_axis = c * ax0 + s * ax1
    y_axis = jnp.cross(nrm, x_axis)
    return x_axis, y_axis


if __name__ == "__main__":
    B, N, K = 2, 64, 8          # M = B*N = 128
    key = jax.random.PRNGKey(0)
    k1, k2, k3, kp = jax.random.split(key, 4)

    xyz = jax.random.normal(k1, (B, N, 6), jnp.float32)          # xyz(3) + normal(3)
    neighbors = jax.random.randint(k2, (B, N, K), 0, N, jnp.int32)
    local_axis = jax.random.normal(k3, (B, N, 3, 3), jnp.float32)
    params = init_params(kp)

    x_axis, y_axis, normal = axisnet_forward(xyz, neighbors, local_axis, params)
    jax.block_until_ready((x_axis, y_axis, normal))

    # sanity check against a plain-JAX reference of the in-kernel math
    M = B * N
    gather = jax.vmap(lambda p, i: p[i])
    xyz3, nrm_full = xyz[:, :, :3], xyz[:, :, 3:]
    gxyz = gather(xyz3, neighbors)
    gnrm = gather(nrm_full, neighbors)
    cat = jnp.concatenate([jnp.matmul(gxyz - xyz3[:, :, None, :], local_axis),
                           gxyz, jnp.matmul(gnrm, local_axis)], axis=3)
    feat_scr = jnp.transpose(cat, (0, 3, 2, 1)).reshape(M, K, 9)
    ref_x, ref_y = reference_tail(feat_scr,
                                  local_axis[..., 0].reshape(M, 3),
                                  local_axis[..., 1].reshape(M, 3),
                                  nrm_full.reshape(M, 3), params)
    np.testing.assert_allclose(np.asarray(x_axis).reshape(M, 3), np.asarray(ref_x),
                               rtol=2e-2, atol=2e-2)
    np.testing.assert_allclose(np.asarray(y_axis).reshape(M, 3), np.asarray(ref_y),
                               rtol=2e-2, atol=2e-2)

    print("KERNEL_OK")
</pallas_src>

<mosaic_0001>
module attributes {stable_mosaic.version = 11 : i64} {
  func.func @axisnet_kernel(%arg0: i32, %arg1: memref<128x128xbf16, #tpu.memory_space<vmem>>, %arg2: memref<16x128xf32, #tpu.memory_space<vmem>>, %arg3: memref<176x64xbf16, #tpu.memory_space<vmem>>, %arg4: memref<216x1xf32, #tpu.memory_space<vmem>>, %arg5: memref<8x128xf32, #tpu.memory_space<vmem>>) attributes {dimension_semantics = [#tpu.dimension_semantics<parallel>], iteration_bounds = array<i64: 1>, scalar_prefetch = 0 : i64, scratch_operands = 0 : i64, tpu.core_type = #tpu.core_type<tc>, window_params = [{transform_indices = @transform_0, window_bounds = array<i64: 128, 128>}, {transform_indices = @transform_1, window_bounds = array<i64: 16, 128>}, {pipeline_mode = #tpu.pipeline_mode<synchronous>, transform_indices = @transform_2, window_bounds = array<i64: 176, 64>}, {pipeline_mode = #tpu.pipeline_mode<synchronous>, transform_indices = @transform_3, window_bounds = array<i64: 216, 1>}, {transform_indices = @transform_4, window_bounds = array<i64: 8, 128>}]} {
    %c0 = arith.constant 0 : index
    %c0_0 = arith.constant 0 : index
    %0 = vector.load %arg3[%c0, %c0_0] : memref<176x64xbf16, #tpu.memory_space<vmem>>, vector<16x16xbf16>
    %c16 = arith.constant 16 : index
    %c0_1 = arith.constant 0 : index
    %1 = vector.load %arg3[%c16, %c0_1] : memref<176x64xbf16, #tpu.memory_space<vmem>>, vector<32x16xbf16>
    %c48 = arith.constant 48 : index
    %c0_2 = arith.constant 0 : index
    %2 = vector.load %arg3[%c48, %c0_2] : memref<176x64xbf16, #tpu.memory_space<vmem>>, vector<64x32xbf16>
    %c112 = arith.constant 112 : index
    %c0_3 = arith.constant 0 : index
    %3 = vector.load %arg3[%c112, %c0_3] : memref<176x64xbf16, #tpu.memory_space<vmem>>, vector<32x64xbf16>
    %c144 = arith.constant 144 : index
    %c0_4 = arith.constant 0 : index
    %4 = vector.load %arg3[%c144, %c0_4] : memref<176x64xbf16, #tpu.memory_space<vmem>>, vector<32x32xbf16>
    %c0_5 = arith.constant 0 : index
    %c0_6 = arith.constant 0 : index
    %5 = vector.load %arg4[%c0_5, %c0_6] : memref<216x1xf32, #tpu.memory_space<vmem>>, vector<16x1xf32>
    %c16_7 = arith.constant 16 : index
    %c0_8 = arith.constant 0 : index
    %6 = vector.load %arg4[%c16_7, %c0_8] : memref<216x1xf32, #tpu.memory_space<vmem>>, vector<32x1xf32>
    %c48_9 = arith.constant 48 : index
    %c0_10 = arith.constant 0 : index
    %7 = vector.load %arg4[%c48_9, %c0_10] : memref<216x1xf32, #tpu.memory_space<vmem>>, vector<64x1xf32>
    %c112_11 = arith.constant 112 : index
    %c0_12 = arith.constant 0 : index
    %8 = vector.load %arg4[%c112_11, %c0_12] : memref<216x1xf32, #tpu.memory_space<vmem>>, vector<32x1xf32>
    %c144_13 = arith.constant 144 : index
    %c0_14 = arith.constant 0 : index
    %9 = vector.load %arg4[%c144_13, %c0_14] : memref<216x1xf32, #tpu.memory_space<vmem>>, vector<32x1xf32>
    %c176 = arith.constant 176 : index
    %c0_15 = arith.constant 0 : index
    %10 = vector.load %arg4[%c176, %c0_15] : memref<216x1xf32, #tpu.memory_space<vmem>>, vector<32x1xf32>
    %c208 = arith.constant 208 : index
    %c0_16 = arith.constant 0 : index
    %11 = vector.load %arg4[%c208, %c0_16] : memref<216x1xf32, #tpu.memory_space<vmem>>, vector<1x1xf32>
    %cst = arith.constant 0.000000e+00 : f32
    %12 = vector.broadcast %cst : f32 to vector<64x128xf32>
    %c0_17 = arith.constant 0 : index
    %c0_18 = arith.constant 0 : index
    %13 = vector.load %arg1[%c0_17, %c0_18] : memref<128x128xbf16, #tpu.memory_space<vmem>>, vector<16x128xbf16>
    %cst_19 = arith.constant dense<0.000000e+00> : vector<16x128xf32>
    %14 = tpu.matmul %0, %13, %cst_19 {dimension_numbers = #tpu.dot_dimension_numbers<[1], [0], [0], [1], [0, 0, 1, 1], [], []>} : vector<16x16xbf16>, vector<16x128xbf16>, vector<16x128xf32> -> vector<16x128xf32>
    %15 = vector.broadcast %5 : vector<16x1xf32> to vector<16x128xf32>
    %16 = arith.addf %14, %15 : vector<16x128xf32>
    %cst_20 = arith.constant 0.000000e+00 : f32
    %17 = vector.broadcast %cst_20 : f32 to vector<16x128xf32>
    %18 = arith.maximumf %16, %17 : vector<16x128xf32>
    %19 = arith.truncf %18 : vector<16x128xf32> to vector<16x128xbf16>
    %cst_21 = arith.constant dense<0.000000e+00> : vector<32x128xf32>
    %20 = tpu.matmul %1, %19, %cst_21 {dimension_numbers = #tpu.dot_dimension_numbers<[1], [0], [0], [1], [0, 0, 1, 1], [], []>} : vector<32x16xbf16>, vector<16x128xbf16>, vector<32x128xf32> -> vector<32x128xf32>
    %21 = vector.broadcast %6 : vector<32x1xf32> to vector<32x128xf32>
    %22 = arith.addf %20, %21 : vector<32x128xf32>
    %cst_22 = arith.constant 0.000000e+00 : f32
    %23 = vector.broadcast %cst_22 : f32 to vector<32x128xf32>
    %24 = arith.maximumf %22, %23 : vector<32x128xf32>
    %25 = arith.truncf %24 : vector<32x128xf32> to vector<32x128xbf16>
    %cst_23 = arith.constant dense<0.000000e+00> : vector<64x128xf32>
    %26 = tpu.matmul %2, %25, %cst_23 {dimension_numbers = #tpu.dot_dimension_numbers<[1], [0], [0], [1], [0, 0, 1, 1], [], []>} : vector<64x32xbf16>, vector<32x128xbf16>, vector<64x128xf32> -> vector<64x128xf32>
    %27 = vector.broadcast %7 : vector<64x1xf32> to vector<64x128xf32>
    %28 = arith.addf %26, %27 : vector<64x128xf32>
    %cst_24 = arith.constant 0.000000e+00 : f32
    %29 = vector.broadcast %cst_24 : f32 to vector<64x128xf32>
    %30 = arith.maximumf %28, %29 : vector<64x128xf32>
    %31 = arith.maximumf %12, %30 : vector<64x128xf32>
    %c16_25 = arith.constant 16 : index
    %c0_26 = arith.constant 0 : index
    %32 = vector.load %arg1[%c16_25, %c0_26] : memref<128x128xbf16, #tpu.memory_space<vmem>>, vector<16x128xbf16>
    %cst_27 = arith.constant dense<0.000000e+00> : vector<16x128xf32>
    %33 = tpu.matmul %0, %32, %cst_27 {dimension_numbers = #tpu.dot_dimension_numbers<[1], [0], [0], [1], [0, 0, 1, 1], [], []>} : vector<16x16xbf16>, vector<16x128xbf16>, vector<16x128xf32> -> vector<16x128xf32>
    %34 = vector.broadcast %5 : vector<16x1xf32> to vector<16x128xf32>
    %35 = arith.addf %33, %34 : vector<16x128xf32>
    %cst_28 = arith.constant 0.000000e+00 : f32
    %36 = vector.broadcast %cst_28 : f32 to vector<16x128xf32>
    %37 = arith.maximumf %35, %36 : vector<16x128xf32>
    %38 = arith.truncf %37 : vector<16x128xf32> to vector<16x128xbf16>
    %cst_29 = arith.constant dense<0.000000e+00> : vector<32x128xf32>
    %39 = tpu.matmul %1, %38, %cst_29 {dimension_numbers = #tpu.dot_dimension_numbers<[1], [0], [0], [1], [0, 0, 1, 1], [], []>} : vector<32x16xbf16>, vector<16x128xbf16>, vector<32x128xf32> -> vector<32x128xf32>
    %40 = vector.broadcast %6 : vector<32x1xf32> to vector<32x128xf32>
    %41 = arith.addf %39, %40 : vector<32x128xf32>
    %cst_30 = arith.constant 0.000000e+00 : f32
    %42 = vector.broadcast %cst_30 : f32 to vector<32x128xf32>
    %43 = arith.maximumf %41, %42 : vector<32x128xf32>
    %44 = arith.truncf %43 : vector<32x128xf32> to vector<32x128xbf16>
    %cst_31 = arith.constant dense<0.000000e+00> : vector<64x128xf32>
    %45 = tpu.matmul %2, %44, %cst_31 {dimension_numbers = #tpu.dot_dimension_numbers<[1], [0], [0], [1], [0, 0, 1, 1], [], []>} : vector<64x32xbf16>, vector<32x128xbf16>, vector<64x128xf32> -> vector<64x128xf32>
    %46 = vector.broadcast %7 : vector<64x1xf32> to vector<64x128xf32>
    %47 = arith.addf %45, %46 : vector<64x128xf32>
    %cst_32 = arith.constant 0.000000e+00 : f32
    %48 = vector.broadcast %cst_32 : f32 to vector<64x128xf32>
    %49 = arith.maximumf %47, %48 : vector<64x128xf32>
    %50 = arith.maximumf %31, %49 : vector<64x128xf32>
    %c32 = arith.constant 32 : index
    %c0_33 = arith.constant 0 : index
    %51 = vector.load %arg1[%c32, %c0_33] : memref<128x128xbf16, #tpu.memory_space<vmem>>, vector<16x128xbf16>
    %cst_34 = arith.constant dense<0.000000e+00> : vector<16x128xf32>
    %52 = tpu.matmul %0, %51, %cst_34 {dimension_numbers = #tpu.dot_dimension_numbers<[1], [0], [0], [1], [0, 0, 1, 1], [], []>} : vector<16x16xbf16>, vector<16x128xbf16>, vector<16x128xf32> -> vector<16x128xf32>
    %53 = vector.broadcast %5 : vector<16x1xf32> to vector<16x128xf32>
    %54 = arith.addf %52, %53 : vector<16x128xf32>
    %cst_35 = arith.constant 0.000000e+00 : f32
    %55 = vector.broadcast %cst_35 : f32 to vector<16x128xf32>
    %56 = arith.maximumf %54, %55 : vector<16x128xf32>
    %57 = arith.truncf %56 : vector<16x128xf32> to vector<16x128xbf16>
    %cst_36 = arith.constant dense<0.000000e+00> : vector<32x128xf32>
    %58 = tpu.matmul %1, %57, %cst_36 {dimension_numbers = #tpu.dot_dimension_numbers<[1], [0], [0], [1], [0, 0, 1, 1], [], []>} : vector<32x16xbf16>, vector<16x128xbf16>, vector<32x128xf32> -> vector<32x128xf32>
    %59 = vector.broadcast %6 : vector<32x1xf32> to vector<32x128xf32>
    %60 = arith.addf %58, %59 : vector<32x128xf32>
    %cst_37 = arith.constant 0.000000e+00 : f32
    %61 = vector.broadcast %cst_37 : f32 to vector<32x128xf32>
    %62 = arith.maximumf %60, %61 : vector<32x128xf32>
    %63 = arith.truncf %62 : vector<32x128xf32> to vector<32x128xbf16>
    %cst_38 = arith.constant dense<0.000000e+00> : vector<64x128xf32>
    %64 = tpu.matmul %2, %63, %cst_38 {dimension_numbers = #tpu.dot_dimension_numbers<[1], [0], [0], [1], [0, 0, 1, 1], [], []>} : vector<64x32xbf16>, vector<32x128xbf16>, vector<64x128xf32> -> vector<64x128xf32>
    %65 = vector.broadcast %7 : vector<64x1xf32> to vector<64x128xf32>
    %66 = arith.addf %64, %65 : vector<64x128xf32>
    %cst_39 = arith.constant 0.000000e+00 : f32
    %67 = vector.broadcast %cst_39 : f32 to vector<64x128xf32>
    %68 = arith.maximumf %66, %67 : vector<64x128xf32>
    %69 = arith.maximumf %50, %68 : vector<64x128xf32>
    %c48_40 = arith.constant 48 : index
    %c0_41 = arith.constant 0 : index
    %70 = vector.load %arg1[%c48_40, %c0_41] : memref<128x128xbf16, #tpu.memory_space<vmem>>, vector<16x128xbf16>
    %cst_42 = arith.constant dense<0.000000e+00> : vector<16x128xf32>
    %71 = tpu.matmul %0, %70, %cst_42 {dimension_numbers = #tpu.dot_dimension_numbers<[1], [0], [0], [1], [0, 0, 1, 1], [], []>} : vector<16x16xbf16>, vector<16x128xbf16>, vector<16x128xf32> -> vector<16x128xf32>
    %72 = vector.broadcast %5 : vector<16x1xf32> to vector<16x128xf32>
    %73 = arith.addf %71, %72 : vector<16x128xf32>
    %cst_43 = arith.constant 0.000000e+00 : f32
    %74 = vector.broadcast %cst_43 : f32 to vector<16x128xf32>
    %75 = arith.maximumf %73, %74 : vector<16x128xf32>
    %76 = arith.truncf %75 : vector<16x128xf32> to vector<16x128xbf16>
    %cst_44 = arith.constant dense<0.000000e+00> : vector<32x128xf32>
    %77 = tpu.matmul %1, %76, %cst_44 {dimension_numbers = #tpu.dot_dimension_numbers<[1], [0], [0], [1], [0, 0, 1, 1], [], []>} : vector<32x16xbf16>, vector<16x128xbf16>, vector<32x128xf32> -> vector<32x128xf32>
    %78 = vector.broadcast %6 : vector<32x1xf32> to vector<32x128xf32>
    %79 = arith.addf %77, %78 : vector<32x128xf32>
    %cst_45 = arith.constant 0.000000e+00 : f32
    %80 = vector.broadcast %cst_45 : f32 to vector<32x128xf32>
    %81 = arith.maximumf %79, %80 : vector<32x128xf32>
    %82 = arith.truncf %81 : vector<32x128xf32> to vector<32x128xbf16>
    %cst_46 = arith.constant dense<0.000000e+00> : vector<64x128xf32>
    %83 = tpu.matmul %2, %82, %cst_46 {dimension_numbers = #tpu.dot_dimension_numbers<[1], [0], [0], [1], [0, 0, 1, 1], [], []>} : vector<64x32xbf16>, vector<32x128xbf16>, vector<64x128xf32> -> vector<64x128xf32>
    %84 = vector.broadcast %7 : vector<64x1xf32> to vector<64x128xf32>
    %85 = arith.addf %83, %84 : vector<64x128xf32>
    %cst_47 = arith.constant 0.000000e+00 : f32
    %86 = vector.broadcast %cst_47 : f32 to vector<64x128xf32>
    %87 = arith.maximumf %85, %86 : vector<64x128xf32>
    %88 = arith.maximumf %69, %87 : vector<64x128xf32>
    %c64 = arith.constant 64 : index
    %c0_48 = arith.constant 0 : index
    %89 = vector.load %arg1[%c64, %c0_48] : memref<128x128xbf16, #tpu.memory_space<vmem>>, vector<16x128xbf16>
    %cst_49 = arith.constant dense<0.000000e+00> : vector<16x128xf32>
    %90 = tpu.matmul %0, %89, %cst_49 {dimension_numbers = #tpu.dot_dimension_numbers<[1], [0], [0], [1], [0, 0, 1, 1], [], []>} : vector<16x16xbf16>, vector<16x128xbf16>, vector<16x128xf32> -> vector<16x128xf32>
    %91 = vector.broadcast %5 : vector<16x1xf32> to vector<16x128xf32>
    %92 = arith.addf %90, %91 : vector<16x128xf32>
    %cst_50 = arith.constant 0.000000e+00 : f32
    %93 = vector.broadcast %cst_50 : f32 to vector<16x128xf32>
    %94 = arith.maximumf %92, %93 : vector<16x128xf32>
    %95 = arith.truncf %94 : vector<16x128xf32> to vector<16x128xbf16>
    %cst_51 = arith.constant dense<0.000000e+00> : vector<32x128xf32>
    %96 = tpu.matmul %1, %95, %cst_51 {dimension_numbers = #tpu.dot_dimension_numbers<[1], [0], [0], [1], [0, 0, 1, 1], [], []>} : vector<32x16xbf16>, vector<16x128xbf16>, vector<32x128xf32> -> vector<32x128xf32>
    %97 = vector.broadcast %6 : vector<32x1xf32> to vector<32x128xf32>
    %98 = arith.addf %96, %97 : vector<32x128xf32>
    %cst_52 = arith.constant 0.000000e+00 : f32
    %99 = vector.broadcast %cst_52 : f32 to vector<32x128xf32>
    %100 = arith.maximumf %98, %99 : vector<32x128xf32>
    %101 = arith.truncf %100 : vector<32x128xf32> to vector<32x128xbf16>
    %cst_53 = arith.constant dense<0.000000e+00> : vector<64x128xf32>
    %102 = tpu.matmul %2, %101, %cst_53 {dimension_numbers = #tpu.dot_dimension_numbers<[1], [0], [0], [1], [0, 0, 1, 1], [], []>} : vector<64x32xbf16>, vector<32x128xbf16>, vector<64x128xf32> -> vector<64x128xf32>
    %103 = vector.broadcast %7 : vector<64x1xf32> to vector<64x128xf32>
    %104 = arith.addf %102, %103 : vector<64x128xf32>
    %cst_54 = arith.constant 0.000000e+00 : f32
    %105 = vector.broadcast %cst_54 : f32 to vector<64x128xf32>
    %106 = arith.maximumf %104, %105 : vector<64x128xf32>
    %107 = arith.maximumf %88, %106 : vector<64x128xf32>
    %c80 = arith.constant 80 : index
    %c0_55 = arith.constant 0 : index
    %108 = vector.load %arg1[%c80, %c0_55] : memref<128x128xbf16, #tpu.memory_space<vmem>>, vector<16x128xbf16>
    %cst_56 = arith.constant dense<0.000000e+00> : vector<16x128xf32>
    %109 = tpu.matmul %0, %108, %cst_56 {dimension_numbers = #tpu.dot_dimension_numbers<[1], [0], [0], [1], [0, 0, 1, 1], [], []>} : vector<16x16xbf16>, vector<16x128xbf16>, vector<16x128xf32> -> vector<16x128xf32>
    %110 = vector.broadcast %5 : vector<16x1xf32> to vector<16x128xf32>
    %111 = arith.addf %109, %110 : vector<16x128xf32>
    %cst_57 = arith.constant 0.000000e+00 : f32
    %112 = vector.broadcast %cst_57 : f32 to vector<16x128xf32>
    %113 = arith.maximumf %111, %112 : vector<16x128xf32>
    %114 = arith.truncf %113 : vector<16x128xf32> to vector<16x128xbf16>
    %cst_58 = arith.constant dense<0.000000e+00> : vector<32x128xf32>
    %115 = tpu.matmul %1, %114, %cst_58 {dimension_numbers = #tpu.dot_dimension_numbers<[1], [0], [0], [1], [0, 0, 1, 1], [], []>} : vector<32x16xbf16>, vector<16x128xbf16>, vector<32x128xf32> -> vector<32x128xf32>
    %116 = vector.broadcast %6 : vector<32x1xf32> to vector<32x128xf32>
    %117 = arith.addf %115, %116 : vector<32x128xf32>
    %cst_59 = arith.constant 0.000000e+00 : f32
    %118 = vector.broadcast %cst_59 : f32 to vector<32x128xf32>
    %119 = arith.maximumf %117, %118 : vector<32x128xf32>
    %120 = arith.truncf %119 : vector<32x128xf32> to vector<32x128xbf16>
    %cst_60 = arith.constant dense<0.000000e+00> : vector<64x128xf32>
    %121 = tpu.matmul %2, %120, %cst_60 {dimension_numbers = #tpu.dot_dimension_numbers<[1], [0], [0], [1], [0, 0, 1, 1], [], []>} : vector<64x32xbf16>, vector<32x128xbf16>, vector<64x128xf32> -> vector<64x128xf32>
    %122 = vector.broadcast %7 : vector<64x1xf32> to vector<64x128xf32>
    %123 = arith.addf %121, %122 : vector<64x128xf32>
    %cst_61 = arith.constant 0.000000e+00 : f32
    %124 = vector.broadcast %cst_61 : f32 to vector<64x128xf32>
    %125 = arith.maximumf %123, %124 : vector<64x128xf32>
    %126 = arith.maximumf %107, %125 : vector<64x128xf32>
    %c96 = arith.constant 96 : index
    %c0_62 = arith.constant 0 : index
    %127 = vector.load %arg1[%c96, %c0_62] : memref<128x128xbf16, #tpu.memory_space<vmem>>, vector<16x128xbf16>
    %cst_63 = arith.constant dense<0.000000e+00> : vector<16x128xf32>
    %128 = tpu.matmul %0, %127, %cst_63 {dimension_numbers = #tpu.dot_dimension_numbers<[1], [0], [0], [1], [0, 0, 1, 1], [], []>} : vector<16x16xbf16>, vector<16x128xbf16>, vector<16x128xf32> -> vector<16x128xf32>
    %129 = vector.broadcast %5 : vector<16x1xf32> to vector<16x128xf32>
    %130 = arith.addf %128, %129 : vector<16x128xf32>
    %cst_64 = arith.constant 0.000000e+00 : f32
    %131 = vector.broadcast %cst_64 : f32 to vector<16x128xf32>
    %132 = arith.maximumf %130, %131 : vector<16x128xf32>
    %133 = arith.truncf %132 : vector<16x128xf32> to vector<16x128xbf16>
    %cst_65 = arith.constant dense<0.000000e+00> : vector<32x128xf32>
    %134 = tpu.matmul %1, %133, %cst_65 {dimension_numbers = #tpu.dot_dimension_numbers<[1], [0], [0], [1], [0, 0, 1, 1], [], []>} : vector<32x16xbf16>, vector<16x128xbf16>, vector<32x128xf32> -> vector<32x128xf32>
    %135 = vector.broadcast %6 : vector<32x1xf32> to vector<32x128xf32>
    %136 = arith.addf %134, %135 : vector<32x128xf32>
    %cst_66 = arith.constant 0.000000e+00 : f32
    %137 = vector.broadcast %cst_66 : f32 to vector<32x128xf32>
    %138 = arith.maximumf %136, %137 : vector<32x128xf32>
    %139 = arith.truncf %138 : vector<32x128xf32> to vector<32x128xbf16>
    %cst_67 = arith.constant dense<0.000000e+00> : vector<64x128xf32>
    %140 = tpu.matmul %2, %139, %cst_67 {dimension_numbers = #tpu.dot_dimension_numbers<[1], [0], [0], [1], [0, 0, 1, 1], [], []>} : vector<64x32xbf16>, vector<32x128xbf16>, vector<64x128xf32> -> vector<64x128xf32>
    %141 = vector.broadcast %7 : vector<64x1xf32> to vector<64x128xf32>
    %142 = arith.addf %140, %141 : vector<64x128xf32>
    %cst_68 = arith.constant 0.000000e+00 : f32
    %143 = vector.broadcast %cst_68 : f32 to vector<64x128xf32>
    %144 = arith.maximumf %142, %143 : vector<64x128xf32>
    %145 = arith.maximumf %126, %144 : vector<64x128xf32>
    %c112_69 = arith.constant 112 : index
    %c0_70 = arith.constant 0 : index
    %146 = vector.load %arg1[%c112_69, %c0_70] : memref<128x128xbf16, #tpu.memory_space<vmem>>, vector<16x128xbf16>
    %cst_71 = arith.constant dense<0.000000e+00> : vector<16x128xf32>
    %147 = tpu.matmul %0, %146, %cst_71 {dimension_numbers = #tpu.dot_dimension_numbers<[1], [0], [0], [1], [0, 0, 1, 1], [], []>} : vector<16x16xbf16>, vector<16x128xbf16>, vector<16x128xf32> -> vector<16x128xf32>
    %148 = vector.broadcast %5 : vector<16x1xf32> to vector<16x128xf32>
    %149 = arith.addf %147, %148 : vector<16x128xf32>
    %cst_72 = arith.constant 0.000000e+00 : f32
    %150 = vector.broadcast %cst_72 : f32 to vector<16x128xf32>
    %151 = arith.maximumf %149, %150 : vector<16x128xf32>
    %152 = arith.truncf %151 : vector<16x128xf32> to vector<16x128xbf16>
    %cst_73 = arith.constant dense<0.000000e+00> : vector<32x128xf32>
    %153 = tpu.matmul %1, %152, %cst_73 {dimension_numbers = #tpu.dot_dimension_numbers<[1], [0], [0], [1], [0, 0, 1, 1], [], []>} : vector<32x16xbf16>, vector<16x128xbf16>, vector<32x128xf32> -> vector<32x128xf32>
    %154 = vector.broadcast %6 : vector<32x1xf32> to vector<32x128xf32>
    %155 = arith.addf %153, %154 : vector<32x128xf32>
    %cst_74 = arith.constant 0.000000e+00 : f32
    %156 = vector.broadcast %cst_74 : f32 to vector<32x128xf32>
    %157 = arith.maximumf %155, %156 : vector<32x128xf32>
    %158 = arith.truncf %157 : vector<32x128xf32> to vector<32x128xbf16>
    %cst_75 = arith.constant dense<0.000000e+00> : vector<64x128xf32>
    %159 = tpu.matmul %2, %158, %cst_75 {dimension_numbers = #tpu.dot_dimension_numbers<[1], [0], [0], [1], [0, 0, 1, 1], [], []>} : vector<64x32xbf16>, vector<32x128xbf16>, vector<64x128xf32> -> vector<64x128xf32>
    %160 = vector.broadcast %7 : vector<64x1xf32> to vector<64x128xf32>
    %161 = arith.addf %159, %160 : vector<64x128xf32>
    %cst_76 = arith.constant 0.000000e+00 : f32
    %162 = vector.broadcast %cst_76 : f32 to vector<64x128xf32>
    %163 = arith.maximumf %161, %162 : vector<64x128xf32>
    %164 = arith.maximumf %145, %163 : vector<64x128xf32>
    %165 = arith.truncf %164 : vector<64x128xf32> to vector<64x128xbf16>
    %cst_77 = arith.constant dense<0.000000e+00> : vector<32x128xf32>
    %166 = tpu.matmul %3, %165, %cst_77 {dimension_numbers = #tpu.dot_dimension_numbers<[1], [0], [0], [1], [0, 0, 1, 1], [], []>} : vector<32x64xbf16>, vector<64x128xbf16>, vector<32x128xf32> -> vector<32x128xf32>
    %167 = vector.broadcast %8 : vector<32x1xf32> to vector<32x128xf32>
    %168 = arith.addf %166, %167 : vector<32x128xf32>
    %cst_78 = arith.constant 0.000000e+00 : f32
    %169 = vector.broadcast %cst_78 : f32 to vector<32x128xf32>
    %170 = arith.maximumf %168, %169 : vector<32x128xf32>
    %171 = arith.truncf %170 : vector<32x128xf32> to vector<32x128xbf16>
    %cst_79 = arith.constant dense<0.000000e+00> : vector<32x128xf32>
    %172 = tpu.matmul %4, %171, %cst_79 {dimension_numbers = #tpu.dot_dimension_numbers<[1], [0], [0], [1], [0, 0, 1, 1], [], []>} : vector<32x32xbf16>, vector<32x128xbf16>, vector<32x128xf32> -> vector<32x128xf32>
    %173 = vector.broadcast %9 : vector<32x1xf32> to vector<32x128xf32>
    %174 = arith.addf %172, %173 : vector<32x128xf32>
    %cst_80 = arith.constant 0.000000e+00 : f32
    %175 = vector.broadcast %cst_80 : f32 to vector<32x128xf32>
    %176 = arith.maximumf %174, %175 : vector<32x128xf32>
    %177 = vector.broadcast %10 : vector<32x1xf32> to vector<32x128xf32>
    %178 = arith.mulf %176, %177 : vector<32x128xf32>
    %cst_81 = arith.constant dense<0.000000e+00> : vector<128xf32>
    %179 = vector.multi_reduction <add>, %178, %cst_81 [0] : vector<32x128xf32> to vector<128xf32>
    %180 = vector.shape_cast %179 : vector<128xf32> to vector<1x128xf32>
    %181 = vector.broadcast %11 : vector<1x1xf32> to vector<1x128xf32>
    %182 = arith.addf %180, %181 : vector<1x128xf32>
    %183 = math.tanh %182 : vector<1x128xf32>
    %cst_82 = arith.constant 6.28318548 : f32
    %184 = vector.broadcast %cst_82 : f32 to vector<1x128xf32>
    %185 = arith.mulf %183, %184 : vector<1x128xf32>
    %186 = math.cos %185 : vector<1x128xf32>
    %187 = math.sin %185 : vector<1x128xf32>
    %c0_83 = arith.constant 0 : index
    %c0_84 = arith.constant 0 : index
    %188 = vector.load %arg2[%c0_83, %c0_84] : memref<16x128xf32, #tpu.memory_space<vmem>>, vector<3x128xf32>
    %c3 = arith.constant 3 : index
    %c0_85 = arith.constant 0 : index
    %189 = vector.load %arg2[%c3, %c0_85] : memref<16x128xf32, #tpu.memory_space<vmem>>, vector<3x128xf32>
    %c6 = arith.constant 6 : index
    %c0_86 = arith.constant 0 : index
    %190 = vector.load %arg2[%c6, %c0_86] : memref<16x128xf32, #tpu.memory_space<vmem>>, vector<3x128xf32>
    %191 = vector.broadcast %186 : vector<1x128xf32> to vector<3x128xf32>
    %192 = arith.mulf %191, %188 : vector<3x128xf32>
    %193 = vector.broadcast %187 : vector<1x128xf32> to vector<3x128xf32>
    %194 = arith.mulf %193, %189 : vector<3x128xf32>
    %195 = arith.addf %192, %194 : vector<3x128xf32>
    %c0_87 = arith.constant 0 : index
    %c0_88 = arith.constant 0 : index
    %196 = vector.load %arg5[%c0_87, %c0_88] : memref<8x128xf32, #tpu.memory_space<vmem>>, vector<3x128xf32>
    tpu.vector_store %arg5[%c0_87, %c0_88], %195 {strides = array<i32>} : memref<8x128xf32, #tpu.memory_space<vmem>>, vector<3x128xf32>,
    %197 = vector.extract_strided_slice %190 {offsets = [1, 0], sizes = [1, 128], strides = [1, 1]} : vector<3x128xf32> to vector<1x128xf32>
    %198 = vector.extract_strided_slice %195 {offsets = [2, 0], sizes = [1, 128], strides = [1, 1]} : vector<3x128xf32> to vector<1x128xf32>
    %199 = arith.mulf %197, %198 : vector<1x128xf32>
    %200 = vector.extract_strided_slice %190 {offsets = [2, 0], sizes = [1, 128], strides = [1, 1]} : vector<3x128xf32> to vector<1x128xf32>
    %201 = vector.extract_strided_slice %195 {offsets = [1, 0], sizes = [1, 128], strides = [1, 1]} : vector<3x128xf32> to vector<1x128xf32>
    %202 = arith.mulf %200, %201 : vector<1x128xf32>
    %203 = arith.subf %199, %202 : vector<1x128xf32>
    %c3_89 = arith.constant 3 : index
    %c0_90 = arith.constant 0 : index
    %204 = vector.load %arg5[%c3_89, %c0_90] : memref<8x128xf32, #tpu.memory_space<vmem>>, vector<1x128xf32>
    tpu.vector_store %arg5[%c3_89, %c0_90], %203 {strides = array<i32>} : memref<8x128xf32, #tpu.memory_space<vmem>>, vector<1x128xf32>,
    %205 = vector.extract_strided_slice %190 {offsets = [2, 0], sizes = [1, 128], strides = [1, 1]} : vector<3x128xf32> to vector<1x128xf32>
    %206 = vector.extract_strided_slice %195 {offsets = [0, 0], sizes = [1, 128], strides = [1, 1]} : vector<3x128xf32> to vector<1x128xf32>
    %207 = arith.mulf %205, %206 : vector<1x128xf32>
    %208 = vector.extract_strided_slice %190 {offsets = [0, 0], sizes = [1, 128], strides = [1, 1]} : vector<3x128xf32> to vector<1x128xf32>
    %209 = vector.extract_strided_slice %195 {offsets = [2, 0], sizes = [1, 128], strides = [1, 1]} : vector<3x128xf32> to vector<1x128xf32>
    %210 = arith.mulf %208, %209 : vector<1x128xf32>
    %211 = arith.subf %207, %210 : vector<1x128xf32>
    %c4 = arith.constant 4 : index
    %c0_91 = arith.constant 0 : index
    %212 = vector.load %arg5[%c4, %c0_91] : memref<8x128xf32, #tpu.memory_space<vmem>>, vector<1x128xf32>
    tpu.vector_store %arg5[%c4, %c0_91], %211 {strides = array<i32>} : memref<8x128xf32, #tpu.memory_space<vmem>>, vector<1x128xf32>,
    %213 = vector.extract_strided_slice %190 {offsets = [0, 0], sizes = [1, 128], strides = [1, 1]} : vector<3x128xf32> to vector<1x128xf32>
    %214 = vector.extract_strided_slice %195 {offsets = [1, 0], sizes = [1, 128], strides = [1, 1]} : vector<3x128xf32> to vector<1x128xf32>
    %215 = arith.mulf %213, %214 : vector<1x128xf32>
    %216 = vector.extract_strided_slice %190 {offsets = [1, 0], sizes = [1, 128], strides = [1, 1]} : vector<3x128xf32> to vector<1x128xf32>
    %217 = vector.extract_strided_slice %195 {offsets = [0, 0], sizes = [1, 128], strides = [1, 1]} : vector<3x128xf32> to vector<1x128xf32>
    %218 = arith.mulf %216, %217 : vector<1x128xf32>
    %219 = arith.subf %215, %218 : vector<1x128xf32>
    %c5 = arith.constant 5 : index
    %c0_92 = arith.constant 0 : index
    %220 = vector.load %arg5[%c5, %c0_92] : memref<8x128xf32, #tpu.memory_space<vmem>>, vector<1x128xf32>
    tpu.vector_store %arg5[%c5, %c0_92], %219 {strides = array<i32>} : memref<8x128xf32, #tpu.memory_space<vmem>>, vector<1x128xf32>,
    %cst_93 = arith.constant 0.000000e+00 : f32
    %221 = vector.broadcast %cst_93 : f32 to vector<2x128xf32>
    %c6_94 = arith.constant 6 : index
    %c0_95 = arith.constant 0 : index
    %222 = vector.load %arg5[%c6_94, %c0_95] : memref<8x128xf32, #tpu.memory_space<vmem>>, vector<2x128xf32>
    tpu.vector_store %arg5[%c6_94, %c0_95], %221 {strides = array<i32>} : memref<8x128xf32, #tpu.memory_space<vmem>>, vector<2x128xf32>,
    return
  }
  func.func @transform_0(%arg0: i32) -> (i32, i32) {
    %c0_i32 = arith.constant 0 : i32
    %c0_i32_0 = arith.constant 0 : i32
    return %c0_i32, %arg0 : i32, i32
  }
  func.func @transform_1(%arg0: i32) -> (i32, i32) {
    %c0_i32 = arith.constant 0 : i32
    %c0_i32_0 = arith.constant 0 : i32
    return %c0_i32, %arg0 : i32, i32
  }
  func.func @transform_2(%arg0: i32) -> (i32, i32) {
    %c0_i32 = arith.constant 0 : i32
    %c0_i32_0 = arith.constant 0 : i32
    %c0_i32_1 = arith.constant 0 : i32
    return %c0_i32, %c0_i32_0 : i32, i32
  }
  func.func @transform_3(%arg0: i32) -> (i32, i32) {
    %c0_i32 = arith.constant 0 : i32
    %c0_i32_0 = arith.constant 0 : i32
    %c0_i32_1 = arith.constant 0 : i32
    return %c0_i32, %c0_i32_0 : i32, i32
  }
  func.func @transform_4(%arg0: i32) -> (i32, i32) {
    %c0_i32 = arith.constant 0 : i32
    %c0_i32_0 = arith.constant 0 : i32
    return %c0_i32, %arg0 : i32, i32
  }
}

</mosaic_0001>

<llo_original>
// kernel: tpu_custom_call.1
$region0: #{tpu_custom_call.1}
  #allocation0 [shape = 'u32[]', space=smem, size = 0x4, offset = 0x4, fixed_abs, tag = 'smem constant byte address 0x4 - core index']
  #allocation1 [shape = 'u32[144,128]{1,0:T(1,128)}', space=vmem, size = 0x12000, scoped, tag = 'internal scratch']
  %s0 = inlined_call_operand.vmem [shape: bf16[128,128], index: 0, kind: input, shape index: {}]
  %s1 = inlined_call_operand.vmem [shape: f32[16,128], index: 1, kind: input, shape index: {}]
  %s2 = inlined_call_operand.vmem [shape: bf16[176,64], index: 2, kind: input, shape index: {}]
  %s3 = inlined_call_operand.vmem [shape: f32[216,1], index: 3, kind: input, shape index: {}]
  %s4 = inlined_call_operand.hbm [shape: f32[8,128], index: 4, kind: output, shape index: {}]
  %s5 = sld [smem:[#allocation0]]
  $region26: #{tpu_custom_call.1} parent=0
    _
  %s7 = ssub.s32 1, %s5
  %s8 = scalar_select 0, %s7, %s5
  $region1: #{tpu_custom_call.1} parent=0
    #allocation2 [shape = 'u8[4096]{0}', space=vmem, size = 0x1000, scoped, tag = 'output window, operand 0, single buffered']
    #allocation3 [shape = 's32[1]{0}', space=sflag, size = 0x4, scoped, tag = 'scoped memory for tpu_custom_call.1']
    %9 = vsyncpa [#allocation3], 0
    // Predicated region
    $region2: #{tpu_custom_call.1} parent=1 // pred_check
      _
    $region3: #{tpu_custom_call.1} parent=1 // pred_check_branch
      %11 = sbr.rel (0) target = $region5
    $region4: #{tpu_custom_call.1} parent=1 // pred_region
      _
    $region5: #{tpu_custom_call.1} parent=1 // pred_fallthru
      _
    // Predicated region
    $region6: #{tpu_custom_call.1} parent=1 // pred_check
      _
    $region7: #{tpu_custom_call.1} parent=1 // pred_check_branch
      %13 = sbr.rel (0) target = $region9
    $region8: #{tpu_custom_call.1} parent=1 // pred_region
      _
    $region9: #{tpu_custom_call.1} parent=1 // pred_fallthru
      _
    // Predicated region
    $region10: #{tpu_custom_call.1} parent=1 // pred_check
      _
    $region11: #{tpu_custom_call.1} parent=1 // pred_check_branch
      %15 = sbr.rel (0) target = $region13
    $region12: #{tpu_custom_call.1} parent=1 // pred_region
      _
    $region13: #{tpu_custom_call.1} parent=1 // pred_fallthru
      _
    // Predicated region
    $region14: #{tpu_custom_call.1} parent=1 // pred_check
      _
    $region15: #{tpu_custom_call.1} parent=1 // pred_check_branch
      %17 = sbr.rel (0) target = $region17
    $region16: #{tpu_custom_call.1} parent=1 // pred_region
      _
    $region17: #{tpu_custom_call.1} parent=1 // pred_fallthru
      _
    %v19 = vld [vmem:[%s2] sm:$0xf]
    %v20 = vld [vmem:[%s2 + $0x4] sm:$0xf]
    %v21 = vld [vmem:[%s2 + $0x8] sm:$0xf]
    %v22 = vld [vmem:[%s2 + $0xc] sm:$0xf]
    %v23 = vld [vmem:[%s2 + $0x10] sm:$0xf]
    %v24 = vld [vmem:[%s2 + $0x14] sm:$0xf]
    %v25 = vld [vmem:[%s2 + $0x18] sm:$0xf]
    %v26 = vld [vmem:[%s2 + $0x1c] sm:$0xf]
    %v27 = vld [vmem:[%s2 + $0x20] sm:$0xf]
    %v28 = vld [vmem:[%s2 + $0x24] sm:$0xf]
    %v29 = vld [vmem:[%s2 + $0x28] sm:$0xf]
    %v30 = vld [vmem:[%s2 + $0x2c] sm:$0xf]
    %v31 = vld [vmem:[%s2 + $0x30] sm:$0xf]
    %v32 = vld [vmem:[%s2 + $0x34] sm:$0xf]
    %v33 = vld [vmem:[%s2 + $0x38] sm:$0xf]
    %v34 = vld [vmem:[%s2 + $0x3c] sm:$0xf]
    %v35 = vld [vmem:[%s2 + $0x40] sm:$0xf]
    %v36 = vld [vmem:[%s2 + $0x44] sm:$0xf]
    %v37 = vld [vmem:[%s2 + $0x48] sm:$0xf]
    %v38 = vld [vmem:[%s2 + $0x4c] sm:$0xf]
    %v39 = vld [vmem:[%s2 + $0x50] sm:$0xf]
    %v40 = vld [vmem:[%s2 + $0x54] sm:$0xf]
    %v41 = vld [vmem:[%s3] sm:$0xff]
    %v42 = vld [vmem:[%s3 + $0x8] sm:$0xff]
    %v43 = vld [vmem:[%s3 + $0x10] sm:$0xff]
    %v44 = vld [vmem:[%s3 + $0x18] sm:$0xff]
    %v45 = vld [vmem:[%s3 + $0x20] sm:$0xff]
    %v46 = vld [vmem:[%s3 + $0x28] sm:$0xff]
    %v47 = vld [vmem:[%s3 + $0x30] sm:$0xff]
    %v48 = vld [vmem:[%s3 + $0x38] sm:$0xff]
    %v49 = vld [vmem:[%s3 + $0x40] sm:$0xff]
    %v50 = vld [vmem:[%s3 + $0x48] sm:$0xff]
    %v51 = vld [vmem:[%s3 + $0x50] sm:$0xff]
    %v52 = vld [vmem:[%s3 + $0x58] sm:$0xff]
    %v53 = vld [vmem:[%s3 + $0x60] sm:$0xff]
    %v54 = vld [vmem:[%s3 + $0x68] sm:$0xff]
    %v55 = vld [vmem:[%s3 + $0x70] sm:$0xff]
    %v56 = vld [vmem:[%s3 + $0x78] sm:$0xff]
    %v57 = vld [vmem:[%s3 + $0x80] sm:$0xff]
    %v58 = vld [vmem:[%s3 + $0x88] sm:$0xff]
    %v59 = vld [vmem:[%s3 + $0x90] sm:$0xff]
    %v60 = vld [vmem:[%s3 + $0x98] sm:$0xff]
    %v61 = vld [vmem:[%s3 + $0xa0] sm:$0xff]
    %v62 = vld [vmem:[%s3 + $0xa8] sm:$0xff]
    %v63 = vld [vmem:[%s3 + $0xb0] sm:$0xff]
    %v64 = vld [vmem:[%s3 + $0xb8] sm:$0xff]
    %v65 = vld [vmem:[%s3 + $0xc0] sm:$0xff]
    %v66 = vld [vmem:[%s3 + $0xc8] sm:$0xff]
    %v67 = vld [vmem:[%s3 + $0xd0] sm:$0x1]
    %v68 = vld [vmem:[%s0] sm:$0xf]
    %v69 = vld [vmem:[%s0 + $0x4] sm:$0xf]
    %71 = vset.pattern.permute.xlu0 0
    %72 = vperm.xlu0 %71, %v41
    %v73 = vpop.permute.xlu0 %72
    %76 = vset.pattern.permute.xlu0 0
    %77 = vperm.xlu0 %76, %v42
    %v78 = vpop.permute.xlu0 %77
    %v82 = vunpack.c.l.b16 %v19
    %v83 = vunpack.c.l.b16 %v20
    %v84 = vpack.c.b16 %v83, %v82
    %v87 = vunpack.c.l.b16 %v68
    %v88 = vunpack.c.l.b16 %v69
    %v89 = vpack.c.b16 %v88, %v87
    %vm91 = vcmask 130048
    %v93 = vsel %vm91, %v84, 0
    %95 = vmatprep.subr.bf16.mxu0 0
    %96 = vmatpush1.bf16.msra.mxu0 %v89
    %97 = vmatprep.subr.bf16.mxu0 0
    %98 = vmatpush1.bf16.msra.mxu0 0
    %99 = vmatprep.subr.bf16.mxu0 0
    %100 = vmatpush1.bf16.msra.mxu0 0
    %101 = vmatprep.subr.bf16.mxu0 0
    %102 = vmatpush1.bf16.msra.mxu0 0
    %103 = vmatprep.subr.bf16.mxu0 0
    %104 = vmatpush1.bf16.msra.mxu0 0
    %105 = vmatprep.subr.bf16.mxu0 0
    %106 = vmatpush1.bf16.msra.mxu0 0
    %107 = vmatprep.subr.bf16.mxu0 0
    %108 = vmatpush1.bf16.msra.mxu0 0
    %109 = vmatprep.subr.bf16.mxu0 0
    %110 = vmatpush1.bf16.msra.mxu0 0
    %111 = vmatprep.subr.bf16.mxu0 0
    %112 = vmatpush1.bf16.msra.mxu0 0
    %113 = vmatprep.subr.bf16.mxu0 0
    %114 = vmatpush1.bf16.msra.mxu0 0
    %115 = vmatprep.subr.bf16.mxu0 0
    %116 = vmatpush1.bf16.msra.mxu0 0
    %117 = vmatprep.subr.bf16.mxu0 0
    %118 = vmatpush1.bf16.msra.mxu0 0
    %119 = vmatprep.subr.bf16.mxu0 0
    %120 = vmatpush1.bf16.msra.mxu0 0
    %121 = vmatprep.subr.bf16.mxu0 0
    %122 = vmatpush1.bf16.msra.mxu0 0
    %123 = vmatprep.subr.bf16.mxu0 0
    %124 = vmatpush1.bf16.msra.mxu0 0
    %125 = vmatprep.subr.bf16.mxu0 0
    %126 = vmatpush1.bf16.msra.mxu0 0
    %127 = vmatprep.mubr.bf16.mxu0 0
    %128 = vmatmul.mubr.bf16.gmra.mrb[0].mxu0 %v93
    %v129 = vpop.f32.mrb[0].mxu0
    %v130 = vadd.f32 %v73, %v129
    %v131 = vpop.f32.mrb[0].mxu0
    %v132 = vpop.f32.mrb[0].mxu0
    %v133 = vadd.f32 %v78, %v132
    %v134 = vpop.f32.mrb[0].mxu0
    %135 = vdwg.mxu0
    %v136 = vmax.f32 %v130, 0.0
    %v137 = vmax.f32 %v133, 0.0
    %v138 = vpack.c.bf16 %v137, %v136
    %140 = vset.pattern.permute.xlu0 0
    %141 = vperm.xlu0 %140, %v43
    %v142 = vpop.permute.xlu0 %141
    %145 = vset.pattern.permute.xlu0 0
    %146 = vperm.xlu0 %145, %v44
    %v147 = vpop.permute.xlu0 %146
    %150 = vset.pattern.permute.xlu0 0
    %151 = vperm.xlu0 %150, %v45
    %v152 = vpop.permute.xlu0 %151
    %155 = vset.pattern.permute.xlu0 0
    %156 = vperm.xlu0 %155, %v46
    %v157 = vpop.permute.xlu0 %156
    %v163 = vunpack.c.l.b16 %v21
    %v164 = vunpack.c.l.b16 %v22
    %v165 = vunpack.c.l.b16 %v23
    %v166 = vunpack.c.l.b16 %v24
    %v167 = vpack.c.b16 %v164, %v163
    %v168 = vpack.c.b16 %v166, %v165
    %v170 = vsel %vm91, %v167, 0
    %v173 = vsel %vm91, %v168, 0
    %175 = vmatprep.subr.bf16.mxu0 0
    %176 = vmatpush1.bf16.msra.mxu0 %v138
    %177 = vmatprep.subr.bf16.mxu0 0
    %178 = vmatpush1.bf16.msra.mxu0 0
    %179 = vmatprep.subr.bf16.mxu0 0
    %180 = vmatpush1.bf16.msra.mxu0 0
    %181 = vmatprep.subr.bf16.mxu0 0
    %182 = vmatpush1.bf16.msra.mxu0 0
    %183 = vmatprep.subr.bf16.mxu0 0
    %184 = vmatpush1.bf16.msra.mxu0 0
    %185 = vmatprep.subr.bf16.mxu0 0
    %186 = vmatpush1.bf16.msra.mxu0 0
    %187 = vmatprep.subr.bf16.mxu0 0
    %188 = vmatpush1.bf16.msra.mxu0 0
    %189 = vmatprep.subr.bf16.mxu0 0
    %190 = vmatpush1.bf16.msra.mxu0 0
    %191 = vmatprep.subr.bf16.mxu0 0
    %192 = vmatpush1.bf16.msra.mxu0 0
    %193 = vmatprep.subr.bf16.mxu0 0
    %194 = vmatpush1.bf16.msra.mxu0 0
    %195 = vmatprep.subr.bf16.mxu0 0
    %196 = vmatpush1.bf16.msra.mxu0 0
    %197 = vmatprep.subr.bf16.mxu0 0
    %198 = vmatpush1.bf16.msra.mxu0 0
    %199 = vmatprep.subr.bf16.mxu0 0
    %200 = vmatpush1.bf16.msra.mxu0 0
    %201 = vmatprep.subr.bf16.mxu0 0
    %202 = vmatpush1.bf16.msra.mxu0 0
    %203 = vmatprep.subr.bf16.mxu0 0
    %204 = vmatpush1.bf16.msra.mxu0 0
    %205 = vmatprep.subr.bf16.mxu0 0
    %206 = vmatpush1.bf16.msra.mxu0 0
    %207 = vmatprep.mubr.bf16.mxu0 0
    %208 = vmatmul.mubr.bf16.gmra.mrb[0].mxu0 %v170
    %v209 = vpop.f32.mrb[0].mxu0
    %v210 = vadd.f32 %v142, %v209
    %v211 = vpop.f32.mrb[0].mxu0
    %v212 = vpop.f32.mrb[0].mxu0
    %v213 = vadd.f32 %v147, %v212
    %v214 = vpop.f32.mrb[0].mxu0
    %215 = vmatprep.mubr.bf16.mxu0 0
    %216 = vmatmul.mubr.bf16.gmra.mrb[0].mxu0 %v173
    %v217 = vpop.f32.mrb[0].mxu0
    %v218 = vadd.f32 %v152, %v217
    %v219 = vpop.f32.mrb[0].mxu0
    %v220 = vpop.f32.mrb[0].mxu0
    %v221 = vadd.f32 %v157, %v220
    %v222 = vpop.f32.mrb[0].mxu0
    %223 = vdwg.mxu0
    %v224 = vmax.f32 %v210, 0.0
    %v225 = vmax.f32 %v213, 0.0
    %v226 = vmax.f32 %v218, 0.0
    %v227 = vmax.f32 %v221, 0.0
    %v228 = vpack.c.bf16 %v225, %v224
    %v229 = vpack.c.bf16 %v227, %v226
    %231 = vset.pattern.permute.xlu0 0
    %232 = vperm.xlu0 %231, %v47
    %v233 = vpop.permute.xlu0 %232
    %236 = vset.pattern.permute.xlu0 0
    %237 = vperm.xlu0 %236, %v48
    %v238 = vpop.permute.xlu0 %237
    %241 = vset.pattern.permute.xlu0 0
    %242 = vperm.xlu0 %241, %v49
    %v243 = vpop.permute.xlu0 %242
    %246 = vset.pattern.permute.xlu0 0
    %247 = vperm.xlu0 %246, %v50
    %v248 = vpop.permute.xlu0 %247
    %251 = vset.pattern.permute.xlu0 0
    %252 = vperm.xlu0 %251, %v51
    %v253 = vpop.permute.xlu0 %252
    %256 = vset.pattern.permute.xlu0 0
    %257 = vperm.xlu0 %256, %v52
    %v258 = vpop.permute.xlu0 %257
    %261 = vset.pattern.permute.xlu0 0
    %262 = vperm.xlu0 %261, %v53
    %v263 = vpop.permute.xlu0 %262
    %266 = vset.pattern.permute.xlu0 0
    %267 = vperm.xlu0 %266, %v54
    %v268 = vpop.permute.xlu0 %267
    %v278 = vunpack.c.l.b16 %v25
    %v279 = vunpack.c.l.b16 %v26
    %v280 = vunpack.c.l.b16 %v27
    %v281 = vunpack.c.l.b16 %v28
    %v282 = vunpack.c.l.b16 %v29
    %v283 = vunpack.c.l.b16 %v30
    %v284 = vunpack.c.l.b16 %v31
    %v285 = vunpack.c.l.b16 %v32
    %v286 = vpack.c.b16 %v279, %v278
    %v287 = vpack.c.b16 %v281, %v280
    %v288 = vpack.c.b16 %v283, %v282
    %v289 = vpack.c.b16 %v285, %v284
    %vm290 = vcmask 261120
    %v292 = vsel %vm290, %v286, 0
    %v295 = vsel %vm290, %v287, 0
    %v298 = vsel %vm290, %v288, 0
    %v301 = vsel %vm290, %v289, 0
    %303 = vmatprep.subr.bf16.mxu0 0
    %304 = vmatpush1.bf16.msra.mxu0 %v228
    %305 = vmatprep.subr.bf16.mxu0 0
    %306 = vmatpush1.bf16.msra.mxu0 %v229
    %307 = vmatprep.subr.bf16.mxu0 0
    %308 = vmatpush1.bf16.msra.mxu0 0
    %309 = vmatprep.subr.bf16.mxu0 0
    %310 = vmatpush1.bf16.msra.mxu0 0
    %311 = vmatprep.subr.bf16.mxu0 0
    %312 = vmatpush1.bf16.msra.mxu0 0
    %313 = vmatprep.subr.bf16.mxu0 0
    %314 = vmatpush1.bf16.msra.mxu0 0
    %315 = vmatprep.subr.bf16.mxu0 0
    %316 = vmatpush1.bf16.msra.mxu0 0
    %317 = vmatprep.subr.bf16.mxu0 0
    %318 = vmatpush1.bf16.msra.mxu0 0
    %319 = vmatprep.subr.bf16.mxu0 0
    %320 = vmatpush1.bf16.msra.mxu0 0
    %321 = vmatprep.subr.bf16.mxu0 0
    %322 = vmatpush1.bf16.msra.mxu0 0
    %323 = vmatprep.subr.bf16.mxu0 0
    %324 = vmatpush1.bf16.msra.mxu0 0
    %325 = vmatprep.subr.bf16.mxu0 0
    %326 = vmatpush1.bf16.msra.mxu0 0
    %327 = vmatprep.subr.bf16.mxu0 0
    %328 = vmatpush1.bf16.msra.mxu0 0
    %329 = vmatprep.subr.bf16.mxu0 0
    %330 = vmatpush1.bf16.msra.mxu0 0
    %331 = vmatprep.subr.bf16.mxu0 0
    %332 = vmatpush1.bf16.msra.mxu0 0
    %333 = vmatprep.subr.bf16.mxu0 0
    %334 = vmatpush1.bf16.msra.mxu0 0
    %335 = vmatprep.mubr.bf16.mxu0 0
    %336 = vmatmul.mubr.bf16.gmra.mrb[0].mxu0 %v292
    %v337 = vpop.f32.mrb[0].mxu0
    %v338 = vadd.f32 %v233, %v337
    %v339 = vpop.f32.mrb[0].mxu0
    %v340 = vpop.f32.mrb[0].mxu0
    %v341 = vadd.f32 %v238, %v340
    %v342 = vpop.f32.mrb[0].mxu0
    %343 = vmatprep.mubr.bf16.mxu0 0
    %344 = vmatmul.mubr.bf16.gmra.mrb[0].mxu0 %v295
    %v345 = vpop.f32.mrb[0].mxu0
    %v346 = vadd.f32 %v243, %v345
    %v347 = vpop.f32.mrb[0].mxu0
    %v348 = vpop.f32.mrb[0].mxu0
    %v349 = vadd.f32 %v248, %v348
    %v350 = vpop.f32.mrb[0].mxu0
    %351 = vmatprep.mubr.bf16.mxu0 0
    %352 = vmatmul.mubr.bf16.gmra.mrb[0].mxu0 %v298
    %v353 = vpop.f32.mrb[0].mxu0
    %v354 = vadd.f32 %v253, %v353
    %v355 = vpop.f32.mrb[0].mxu0
    %v356 = vpop.f32.mrb[0].mxu0
    %v357 = vadd.f32 %v258, %v356
    %v358 = vpop.f32.mrb[0].mxu0
    %359 = vmatprep.mubr.bf16.mxu0 0
    %360 = vmatmul.mubr.bf16.gmra.mrb[0].mxu0 %v301
    %v361 = vpop.f32.mrb[0].mxu0
    %v362 = vadd.f32 %v263, %v361
    %v363 = vpop.f32.mrb[0].mxu0
    %v364 = vpop.f32.mrb[0].mxu0
    %v365 = vadd.f32 %v268, %v364
    %v366 = vpop.f32.mrb[0].mxu0
    %367 = vdwg.mxu0
    %v368 = vmax.f32 %v338, 0.0
    %v369 = vmax.f32 %v341, 0.0
    %v370 = vmax.f32 %v346, 0.0
    %v371 = vmax.f32 %v349, 0.0
    %v372 = vmax.f32 %v354, 0.0
    %v373 = vmax.f32 %v357, 0.0
    %v374 = vmax.f32 %v362, 0.0
    %v375 = vmax.f32 %v365, 0.0
    %v376 = vmax.f32 %v368, 0.0
    %v377 = vmax.f32 %v369, 0.0
    %v378 = vmax.f32 %v370, 0.0
    %v379 = vmax.f32 %v371, 0.0
    %v380 = vmax.f32 %v372, 0.0
    %v381 = vmax.f32 %v373, 0.0
    %v382 = vmax.f32 %v374, 0.0
    %v383 = vmax.f32 %v375, 0.0
    %v384 = vld [vmem:[%s0 + $0x8] sm:$0xf]
    %v385 = vld [vmem:[%s0 + $0xc] sm:$0xf]
    %v388 = vunpack.c.l.b16 %v384
    %v389 = vunpack.c.l.b16 %v385
    %v390 = vpack.c.b16 %v389, %v388
    %392 = vmatprep.subr.bf16.mxu0 0
    %393 = vmatpush1.bf16.msra.mxu0 %v390
    %394 = vmatprep.subr.bf16.mxu0 0
    %395 = vmatpush1.bf16.msra.mxu0 0
    %396 = vmatprep.subr.bf16.mxu0 0
    %397 = vmatpush1.bf16.msra.mxu0 0
    %398 = vmatprep.subr.bf16.mxu0 0
    %399 = vmatpush1.bf16.msra.mxu0 0
    %400 = vmatprep.subr.bf16.mxu0 0
    %401 = vmatpush1.bf16.msra.mxu0 0
    %402 = vmatprep.subr.bf16.mxu0 0
    %403 = vmatpush1.bf16.msra.mxu0 0
    %404 = vmatprep.subr.bf16.mxu0 0
    %405 = vmatpush1.bf16.msra.mxu0 0
    %406 = vmatprep.subr.bf16.mxu0 0
    %407 = vmatpush1.bf16.msra.mxu0 0
    %408 = vmatprep.subr.bf16.mxu0 0
    %409 = vmatpush1.bf16.msra.mxu0 0
    %410 = vmatprep.subr.bf16.mxu0 0
    %411 = vmatpush1.bf16.msra.mxu0 0
    %412 = vmatprep.subr.bf16.mxu0 0
    %413 = vmatpush1.bf16.msra.mxu0 0
    %414 = vmatprep.subr.bf16.mxu0 0
    %415 = vmatpush1.bf16.msra.mxu0 0
    %416 = vmatprep.subr.bf16.mxu0 0
    %417 = vmatpush1.bf16.msra.mxu0 0
    %418 = vmatprep.subr.bf16.mxu0 0
    %419 = vmatpush1.bf16.msra.mxu0 0
    %420 = vmatprep.subr.bf16.mxu0 0
    %421 = vmatpush1.bf16.msra.mxu0 0
    %422 = vmatprep.subr.bf16.mxu0 0
    %423 = vmatpush1.bf16.msra.mxu0 0
    %424 = vmatprep.mubr.bf16.mxu0 0
    %425 = vmatmul.mubr.bf16.gmra.mrb[0].mxu0 %v93
    %v426 = vpop.f32.mrb[0].mxu0
    %v427 = vadd.f32 %v73, %v426
    %v428 = vpop.f32.mrb[0].mxu0
    %v429 = vpop.f32.mrb[0].mxu0
    %v430 = vadd.f32 %v78, %v429
    %v431 = vpop.f32.mrb[0].mxu0
    %432 = vdwg.mxu0
    %v433 = vmax.f32 %v427, 0.0
    %v434 = vmax.f32 %v430, 0.0
    %v435 = vpack.c.bf16 %v434, %v433
    %436 = vmatprep.subr.bf16.mxu0 0
    %437 = vmatpush1.bf16.msra.mxu0 %v435
    %438 = vmatprep.subr.bf16.mxu0 0
    %439 = vmatpush1.bf16.msra.mxu0 0
    %440 = vmatprep.subr.bf16.mxu0 0
    %441 = vmatpush1.bf16.msra.mxu0 0
    %442 = vmatprep.subr.bf16.mxu0 0
    %443 = vmatpush1.bf16.msra.mxu0 0
    %444 = vmatprep.subr.bf16.mxu0 0
    %445 = vmatpush1.bf16.msra.mxu0 0
    %446 = vmatprep.subr.bf16.mxu0 0
    %447 = vmatpush1.bf16.msra.mxu0 0
    %448 = vmatprep.subr.bf16.mxu0 0
    %449 = vmatpush1.bf16.msra.mxu0 0
    %450 = vmatprep.subr.bf16.mxu0 0
    %451 = vmatpush1.bf16.msra.mxu0 0
    %452 = vmatprep.subr.bf16.mxu0 0
    %453 = vmatpush1.bf16.msra.mxu0 0
    %454 = vmatprep.subr.bf16.mxu0 0
    %455 = vmatpush1.bf16.msra.mxu0 0
    %456 = vmatprep.subr.bf16.mxu0 0
    %457 = vmatpush1.bf16.msra.mxu0 0
    %458 = vmatprep.subr.bf16.mxu0 0
    %459 = vmatpush1.bf16.msra.mxu0 0
    %460 = vmatprep.subr.bf16.mxu0 0
    %461 = vmatpush1.bf16.msra.mxu0 0
    %462 = vmatprep.subr.bf16.mxu0 0
    %463 = vmatpush1.bf16.msra.mxu0 0
    %464 = vmatprep.subr.bf16.mxu0 0
    %465 = vmatpush1.bf16.msra.mxu0 0
    %466 = vmatprep.subr.bf16.mxu0 0
    %467 = vmatpush1.bf16.msra.mxu0 0
    %468 = vmatprep.mubr.bf16.mxu0 0
    %469 = vmatmul.mubr.bf16.gmra.mrb[0].mxu0 %v170
    %v470 = vpop.f32.mrb[0].mxu0
    %v471 = vadd.f32 %v142, %v470
    %v472 = vpop.f32.mrb[0].mxu0
    %v473 = vpop.f32.mrb[0].mxu0
    %v474 = vadd.f32 %v147, %v473
    %v475 = vpop.f32.mrb[0].mxu0
    %476 = vmatprep.mubr.bf16.mxu0 0
    %477 = vmatmul.mubr.bf16.gmra.mrb[0].mxu0 %v173
    %v478 = vpop.f32.mrb[0].mxu0
    %v479 = vadd.f32 %v152, %v478
    %v480 = vpop.f32.mrb[0].mxu0
    %v481 = vpop.f32.mrb[0].mxu0
    %v482 = vadd.f32 %v157, %v481
    %v483 = vpop.f32.mrb[0].mxu0
    %484 = vdwg.mxu0
    %v485 = vmax.f32 %v471, 0.0
    %v486 = vmax.f32 %v474, 0.0
    %v487 = vmax.f32 %v479, 0.0
    %v488 = vmax.f32 %v482, 0.0
    %v489 = vpack.c.bf16 %v486, %v485
    %v490 = vpack.c.bf16 %v488, %v487
    %491 = vmatprep.subr.bf16.mxu0 0
    %492 = vmatpush1.bf16.msra.mxu0 %v489
    %493 = vmatprep.subr.bf16.mxu0 0
    %494 = vmatpush1.bf16.msra.mxu0 %v490
    %495 = vmatprep.subr.bf16.mxu0 0
    %496 = vmatpush1.bf16.msra.mxu0 0
    %497 = vmatprep.subr.bf16.mxu0 0
    %498 = vmatpush1.bf16.msra.mxu0 0
    %499 = vmatprep.subr.bf16.mxu0 0
    %500 = vmatpush1.bf16.msra.mxu0 0
    %501 = vmatprep.subr.bf16.mxu0 0
    %502 = vmatpush1.bf16.msra.mxu0 0
    %503 = vmatprep.subr.bf16.mxu0 0
    %504 = vmatpush1.bf16.msra.mxu0 0
    %505 = vmatprep.subr.bf16.mxu0 0
    %506 = vmatpush1.bf16.msra.mxu0 0
    %507 = vmatprep.subr.bf16.mxu0 0
    %508 = vmatpush1.bf16.msra.mxu0 0
    %509 = vmatprep.subr.bf16.mxu0 0
    %510 = vmatpush1.bf16.msra.mxu0 0
    %511 = vmatprep.subr.bf16.mxu0 0
    %512 = vmatpush1.bf16.msra.mxu0 0
    %513 = vmatprep.subr.bf16.mxu0 0
    %514 = vmatpush1.bf16.msra.mxu0 0
    %515 = vmatprep.subr.bf16.mxu0 0
    %516 = vmatpush1.bf16.msra.mxu0 0
    %517 = vmatprep.subr.bf16.mxu0 0
    %518 = vmatpush1.bf16.msra.mxu0 0
    %519 = vmatprep.subr.bf16.mxu0 0
    %520 = vmatpush1.bf16.msra.mxu0 0
    %521 = vmatprep.subr.bf16.mxu0 0
    %522 = vmatpush1.bf16.msra.mxu0 0
    %523 = vmatprep.mubr.bf16.mxu0 0
    %524 = vmatmul.mubr.bf16.gmra.mrb[0].mxu0 %v292
    %v525 = vpop.f32.mrb[0].mxu0
    %v526 = vadd.f32 %v233, %v525
    %v527 = vpop.f32.mrb[0].mxu0
    %v528 = vpop.f32.mrb[0].mxu0
    %v529 = vadd.f32 %v238, %v528
    %v530 = vpop.f32.mrb[0].mxu0
    %531 = vmatprep.mubr.bf16.mxu0 0
    %532 = vmatmul.mubr.bf16.gmra.mrb[0].mxu0 %v295
    %v533 = vpop.f32.mrb[0].mxu0
    %v534 = vadd.f32 %v243, %v533
    %v535 = vpop.f32.mrb[0].mxu0
    %v536 = vpop.f32.mrb[0].mxu0
    %v537 = vadd.f32 %v248, %v536
    %v538 = vpop.f32.mrb[0].mxu0
    %539 = vmatprep.mubr.bf16.mxu0 0
    %540 = vmatmul.mubr.bf16.gmra.mrb[0].mxu0 %v298
    %v541 = vpop.f32.mrb[0].mxu0
    %v542 = vadd.f32 %v253, %v541
    %v543 = vpop.f32.mrb[0].mxu0
    %v544 = vpop.f32.mrb[0].mxu0
    %v545 = vadd.f32 %v258, %v544
    %v546 = vpop.f32.mrb[0].mxu0
    %547 = vmatprep.mubr.bf16.mxu0 0
    %548 = vmatmul.mubr.bf16.gmra.mrb[0].mxu0 %v301
    %v549 = vpop.f32.mrb[0].mxu0
    %v550 = vadd.f32 %v263, %v549
    %v551 = vpop.f32.mrb[0].mxu0
    %v552 = vpop.f32.mrb[0].mxu0
    %v553 = vadd.f32 %v268, %v552
    %v554 = vpop.f32.mrb[0].mxu0
    %555 = vdwg.mxu0
    %v556 = vmax.f32 %v526, 0.0
    %v557 = vmax.f32 %v529, 0.0
    %v558 = vmax.f32 %v534, 0.0
    %v559 = vmax.f32 %v537, 0.0
    %v560 = vmax.f32 %v542, 0.0
    %v561 = vmax.f32 %v545, 0.0
    %v562 = vmax.f32 %v550, 0.0
    %v563 = vmax.f32 %v553, 0.0
    %v564 = vmax.f32 %v376, %v556
    %v565 = vmax.f32 %v377, %v557
    %v566 = vmax.f32 %v378, %v558
    %v567 = vmax.f32 %v379, %v559
    %v568 = vmax.f32 %v380, %v560
    %v569 = vmax.f32 %v381, %v561
    %v570 = vmax.f32 %v382, %v562
    %v571 = vmax.f32 %v383, %v563
    %v572 = vld [vmem:[%s0 + $0x10] sm:$0xf]
    %v573 = vld [vmem:[%s0 + $0x14] sm:$0xf]
    %v576 = vunpack.c.l.b16 %v572
    %v577 = vunpack.c.l.b16 %v573
    %v578 = vpack.c.b16 %v577, %v576
    %580 = vmatprep.subr.bf16.mxu0 0
    %581 = vmatpush1.bf16.msra.mxu0 %v578
    %582 = vmatprep.subr.bf16.mxu0 0
    %583 = vmatpush1.bf16.msra.mxu0 0
    %584 = vmatprep.subr.bf16.mxu0 0
    %585 = vmatpush1.bf16.msra.mxu0 0
    %586 = vmatprep.subr.bf16.mxu0 0
    %587 = vmatpush1.bf16.msra.mxu0 0
    %588 = vmatprep.subr.bf16.mxu0 0
    %589 = vmatpush1.bf16.msra.mxu0 0
    %590 = vmatprep.subr.bf16.mxu0 0
    %591 = vmatpush1.bf16.msra.mxu0 0
    %592 = vmatprep.subr.bf16.mxu0 0
    %593 = vmatpush1.bf16.msra.mxu0 0
    %594 = vmatprep.subr.bf16.mxu0 0
    %595 = vmatpush1.bf16.msra.mxu0 0
    %596 = vmatprep.subr.bf16.mxu0 0
    %597 = vmatpush1.bf16.msra.mxu0 0
    %598 = vmatprep.subr.bf16.mxu0 0
    %599 = vmatpush1.bf16.msra.mxu0 0
    %600 = vmatprep.subr.bf16.mxu0 0
    %601 = vmatpush1.bf16.msra.mxu0 0
    %602 = vmatprep.subr.bf16.mxu0 0
    %603 = vmatpush1.bf16.msra.mxu0 0
    %604 = vmatprep.subr.bf16.mxu0 0
    %605 = vmatpush1.bf16.msra.mxu0 0
    %606 = vmatprep.subr.bf16.mxu0 0
    %607 = vmatpush1.bf16.msra.mxu0 0
    %608 = vmatprep.subr.bf16.mxu0 0
    %609 = vmatpush1.bf16.msra.mxu0 0
    %610 = vmatprep.subr.bf16.mxu0 0
    %611 = vmatpush1.bf16.msra.mxu0 0
    %612 = vmatprep.mubr.bf16.mxu0 0
    %613 = vmatmul.mubr.bf16.gmra.mrb[0].mxu0 %v93
    %v614 = vpop.f32.mrb[0].mxu0
    %v615 = vadd.f32 %v73, %v614
    %v616 = vpop.f32.mrb[0].mxu0
    %v617 = vpop.f32.mrb[0].mxu0
    %v618 = vadd.f32 %v78, %v617
    %v619 = vpop.f32.mrb[0].mxu0
    %620 = vdwg.mxu0
    %v621 = vmax.f32 %v615, 0.0
    %v622 = vmax.f32 %v618, 0.0
    %v623 = vpack.c.bf16 %v622, %v621
    %624 = vmatprep.subr.bf16.mxu0 0
    %625 = vmatpush1.bf16.msra.mxu0 %v623
    %626 = vmatprep.subr.bf16.mxu0 0
    %627 = vmatpush1.bf16.msra.mxu0 0
    %628 = vmatprep.subr.bf16.mxu0 0
    %629 = vmatpush1.bf16.msra.mxu0 0
    %630 = vmatprep.subr.bf16.mxu0 0
    %631 = vmatpush1.bf16.msra.mxu0 0
    %632 = vmatprep.subr.bf16.mxu0 0
    %633 = vmatpush1.bf16.msra.mxu0 0
    %634 = vmatprep.subr.bf16.mxu0 0
    %635 = vmatpush1.bf16.msra.mxu0 0
    %636 = vmatprep.subr.bf16.mxu0 0
    %637 = vmatpush1.bf16.msra.mxu0 0
    %638 = vmatprep.subr.bf16.mxu0 0
    %639 = vmatpush1.bf16.msra.mxu0 0
    %640 = vmatprep.subr.bf16.mxu0 0
    %641 = vmatpush1.bf16.msra.mxu0 0
    %642 = vmatprep.subr.bf16.mxu0 0
    %643 = vmatpush1.bf16.msra.mxu0 0
    %644 = vmatprep.subr.bf16.mxu0 0
    %645 = vmatpush1.bf16.msra.mxu0 0
    %646 = vmatprep.subr.bf16.mxu0 0
    %647 = vmatpush1.bf16.msra.mxu0 0
    %648 = vmatprep.subr.bf16.mxu0 0
    %649 = vmatpush1.bf16.msra.mxu0 0
    %650 = vmatprep.subr.bf16.mxu0 0
    %651 = vmatpush1.bf16.msra.mxu0 0
    %652 = vmatprep.subr.bf16.mxu0 0
    %653 = vmatpush1.bf16.msra.mxu0 0
    %654 = vmatprep.subr.bf16.mxu0 0
    %655 = vmatpush1.bf16.msra.mxu0 0
    %656 = vmatprep.mubr.bf16.mxu0 0
    %657 = vmatmul.mubr.bf16.gmra.mrb[0].mxu0 %v170
    %v658 = vpop.f32.mrb[0].mxu0
    %v659 = vadd.f32 %v142, %v658
    %v660 = vpop.f32.mrb[0].mxu0
    %v661 = vpop.f32.mrb[0].mxu0
    %v662 = vadd.f32 %v147, %v661
    %v663 = vpop.f32.mrb[0].mxu0
    %664 = vmatprep.mubr.bf16.mxu0 0
    %665 = vmatmul.mubr.bf16.gmra.mrb[0].mxu0 %v173
    %v666 = vpop.f32.mrb[0].mxu0
    %v667 = vadd.f32 %v152, %v666
    %v668 = vpop.f32.mrb[0].mxu0
    %v669 = vpop.f32.mrb[0].mxu0
    %v670 = vadd.f32 %v157, %v669
    %v671 = vpop.f32.mrb[0].mxu0
    %672 = vdwg.mxu0
    %v673 = vmax.f32 %v659, 0.0
    %v674 = vmax.f32 %v662, 0.0
    %v675 = vmax.f32 %v667, 0.0
    %v676 = vmax.f32 %v670, 0.0
    %v677 = vpack.c.bf16 %v674, %v673
    %v678 = vpack.c.bf16 %v676, %v675
    %679 = vmatprep.subr.bf16.mxu0 0
    %680 = vmatpush1.bf16.msra.mxu0 %v677
    %681 = vmatprep.subr.bf16.mxu0 0
    %682 = vmatpush1.bf16.msra.mxu0 %v678
    %683 = vmatprep.subr.bf16.mxu0 0
    %684 = vmatpush1.bf16.msra.mxu0 0
    %685 = vmatprep.subr.bf16.mxu0 0
    %686 = vmatpush1.bf16.msra.mxu0 0
    %687 = vmatprep.subr.bf16.mxu0 0
    %688 = vmatpush1.bf16.msra.mxu0 0
    %689 = vmatprep.subr.bf16.mxu0 0
    %690 = vmatpush1.bf16.msra.mxu0 0
    %691 = vmatprep.subr.bf16.mxu0 0
    %692 = vmatpush1.bf16.msra.mxu0 0
    %693 = vmatprep.subr.bf16.mxu0 0
    %694 = vmatpush1.bf16.msra.mxu0 0
    %695 = vmatprep.subr.bf16.mxu0 0
    %696 = vmatpush1.bf16.msra.mxu0 0
    %697 = vmatprep.subr.bf16.mxu0 0
    %698 = vmatpush1.bf16.msra.mxu0 0
    %699 = vmatprep.subr.bf16.mxu0 0
    %700 = vmatpush1.bf16.msra.mxu0 0
    %701 = vmatprep.subr.bf16.mxu0 0
    %702 = vmatpush1.bf16.msra.mxu0 0
    %703 = vmatprep.subr.bf16.mxu0 0
    %704 = vmatpush1.bf16.msra.mxu0 0
    %705 = vmatprep.subr.bf16.mxu0 0
    %706 = vmatpush1.bf16.msra.mxu0 0
    %707 = vmatprep.subr.bf16.mxu0 0
    %708 = vmatpush1.bf16.msra.mxu0 0
    %709 = vmatprep.subr.bf16.mxu0 0
    %710 = vmatpush1.bf16.msra.mxu0 0
    %711 = vmatprep.mubr.bf16.mxu0 0
    %712 = vmatmul.mubr.bf16.gmra.mrb[0].mxu0 %v292
    %v713 = vpop.f32.mrb[0].mxu0
    %v714 = vadd.f32 %v233, %v713
    %v715 = vpop.f32.mrb[0].mxu0
    %v716 = vpop.f32.mrb[0].mxu0
    %v717 = vadd.f32 %v238, %v716
    %v718 = vpop.f32.mrb[0].mxu0
    %719 = vmatprep.mubr.bf16.mxu0 0
    %720 = vmatmul.mubr.bf16.gmra.mrb[0].mxu0 %v295
    %v721 = vpop.f32.mrb[0].mxu0
    %v722 = vadd.f32 %v243, %v721
    %v723 = vpop.f32.mrb[0].mxu0
    %v724 = vpop.f32.mrb[0].mxu0
    %v725 = vadd.f32 %v248, %v724
    %v726 = vpop.f32.mrb[0].mxu0
    %727 = vmatprep.mubr.bf16.mxu0 0
    %728 = vmatmul.mubr.bf16.gmra.mrb[0].mxu0 %v298
    %v729 = vpop.f32.mrb[0].mxu0
    %v730 = vadd.f32 %v253, %v729
    %v731 = vpop.f32.mrb[0].mxu0
    %v732 = vpop.f32.mrb[0].mxu0
    %v733 = vadd.f32 %v258, %v732
    %v734 = vpop.f32.mrb[0].mxu0
    %735 = vmatprep.mubr.bf16.mxu0 0
    %736 = vmatmul.mubr.bf16.gmra.mrb[0].mxu0 %v301
    %v737 = vpop.f32.mrb[0].mxu0
    %v738 = vadd.f32 %v263, %v737
    %v739 = vpop.f32.mrb[0].mxu0
    %v740 = vpop.f32.mrb[0].mxu0
    %v741 = vadd.f32 %v268, %v740
    %v742 = vpop.f32.mrb[0].mxu0
    %743 = vdwg.mxu0
    %v744 = vmax.f32 %v714, 0.0
    %v745 = vmax.f32 %v717, 0.0
    %v746 = vmax.f32 %v722, 0.0
    %v747 = vmax.f32 %v725, 0.0
    %v748 = vmax.f32 %v730, 0.0
    %v749 = vmax.f32 %v733, 0.0
    %v750 = vmax.f32 %v738, 0.0
    %v751 = vmax.f32 %v741, 0.0
    %v752 = vmax.f32 %v564, %v744
    %v753 = vmax.f32 %v565, %v745
    %v754 = vmax.f32 %v566, %v746
    %v755 = vmax.f32 %v567, %v747
    %v756 = vmax.f32 %v568, %v748
    %v757 = vmax.f32 %v569, %v749
    %v758 = vmax.f32 %v570, %v750
    %v759 = vmax.f32 %v571, %v751
    %v760 = vld [vmem:[%s0 + $0x18] sm:$0xf]
    %v761 = vld [vmem:[%s0 + $0x1c] sm:$0xf]
    %v764 = vunpack.c.l.b16 %v760
    %v765 = vunpack.c.l.b16 %v761
    %v766 = vpack.c.b16 %v765, %v764
    %768 = vmatprep.subr.bf16.mxu0 0
    %769 = vmatpush1.bf16.msra.mxu0 %v766
    %770 = vmatprep.subr.bf16.mxu0 0
    %771 = vmatpush1.bf16.msra.mxu0 0
    %772 = vmatprep.subr.bf16.mxu0 0
    %773 = vmatpush1.bf16.msra.mxu0 0
    %774 = vmatprep.subr.bf16.mxu0 0
    %775 = vmatpush1.bf16.msra.mxu0 0
    %776 = vmatprep.subr.bf16.mxu0 0
    %777 = vmatpush1.bf16.msra.mxu0 0
    %778 = vmatprep.subr.bf16.mxu0 0
    %779 = vmatpush1.bf16.msra.mxu0 0
    %780 = vmatprep.subr.bf16.mxu0 0
    %781 = vmatpush1.bf16.msra.mxu0 0
    %782 = vmatprep.subr.bf16.mxu0 0
    %783 = vmatpush1.bf16.msra.mxu0 0
    %784 = vmatprep.subr.bf16.mxu0 0
    %785 = vmatpush1.bf16.msra.mxu0 0
    %786 = vmatprep.subr.bf16.mxu0 0
    %787 = vmatpush1.bf16.msra.mxu0 0
    %788 = vmatprep.subr.bf16.mxu0 0
    %789 = vmatpush1.bf16.msra.mxu0 0
    %790 = vmatprep.subr.bf16.mxu0 0
    %791 = vmatpush1.bf16.msra.mxu0 0
    %792 = vmatprep.subr.bf16.mxu0 0
    %793 = vmatpush1.bf16.msra.mxu0 0
    %794 = vmatprep.subr.bf16.mxu0 0
    %795 = vmatpush1.bf16.msra.mxu0 0
    %796 = vmatprep.subr.bf16.mxu0 0
    %797 = vmatpush1.bf16.msra.mxu0 0
    %798 = vmatprep.subr.bf16.mxu0 0
    %799 = vmatpush1.bf16.msra.mxu0 0
    %800 = vmatprep.mubr.bf16.mxu0 0
    %801 = vmatmul.mubr.bf16.gmra.mrb[0].mxu0 %v93
    %v802 = vpop.f32.mrb[0].mxu0
    %v803 = vadd.f32 %v73, %v802
    %v804 = vpop.f32.mrb[0].mxu0
    %v805 = vpop.f32.mrb[0].mxu0
    %v806 = vadd.f32 %v78, %v805
    %v807 = vpop.f32.mrb[0].mxu0
    %808 = vdwg.mxu0
    %v809 = vmax.f32 %v803, 0.0
    %v810 = vmax.f32 %v806, 0.0
    %v811 = vpack.c.bf16 %v810, %v809
    %812 = vmatprep.subr.bf16.mxu0 0
    %813 = vmatpush1.bf16.msra.mxu0 %v811
    %814 = vmatprep.subr.bf16.mxu0 0
    %815 = vmatpush1.bf16.msra.mxu0 0
    %816 = vmatprep.subr.bf16.mxu0 0
    %817 = vmatpush1.bf16.msra.mxu0 0
    %818 = vmatprep.subr.bf16.mxu0 0
    %819 = vmatpush1.bf16.msra.mxu0 0
    %820 = vmatprep.subr.bf16.mxu0 0
    %821 = vmatpush1.bf16.msra.mxu0 0
    %822 = vmatprep.subr.bf16.mxu0 0
    %823 = vmatpush1.bf16.msra.mxu0 0
    %824 = vmatprep.subr.bf16.mxu0 0
    %825 = vmatpush1.bf16.msra.mxu0 0
    %826 = vmatprep.subr.bf16.mxu0 0
    %827 = vmatpush1.bf16.msra.mxu0 0
    %828 = vmatprep.subr.bf16.mxu0 0
    %829 = vmatpush1.bf16.msra.mxu0 0
    %830 = vmatprep.subr.bf16.mxu0 0
    %831 = vmatpush1.bf16.msra.mxu0 0
    %832 = vmatprep.subr.bf16.mxu0 0
    %833 = vmatpush1.bf16.msra.mxu0 0
    %834 = vmatprep.subr.bf16.mxu0 0
    %835 = vmatpush1.bf16.msra.mxu0 0
    %836 = vmatprep.subr.bf16.mxu0 0
    %837 = vmatpush1.bf16.msra.mxu0 0
    %838 = vmatprep.subr.bf16.mxu0 0
    %839 = vmatpush1.bf16.msra.mxu0 0
    %840 = vmatprep.subr.bf16.mxu0 0
    %841 = vmatpush1.bf16.msra.mxu0 0
    %842 = vmatprep.subr.bf16.mxu0 0
    %843 = vmatpush1.bf16.msra.mxu0 0
    %844 = vmatprep.mubr.bf16.mxu0 0
    %845 = vmatmul.mubr.bf16.gmra.mrb[0].mxu0 %v170
    %v846 = vpop.f32.mrb[0].mxu0
    %v847 = vadd.f32 %v142, %v846
    %v848 = vpop.f32.mrb[0].mxu0
    %v849 = vpop.f32.mrb[0].mxu0
    %v850 = vadd.f32 %v147, %v849
    %v851 = vpop.f32.mrb[0].mxu0
    %852 = vmatprep.mubr.bf16.mxu0 0
    %853 = vmatmul.mubr.bf16.gmra.mrb[0].mxu0 %v173
    %v854 = vpop.f32.mrb[0].mxu0
    %v855 = vadd.f32 %v152, %v854
    %v856 = vpop.f32.mrb[0].mxu0
    %v857 = vpop.f32.mrb[0].mxu0
    %v858 = vadd.f32 %v157, %v857
    %v859 = vpop.f32.mrb[0].mxu0
    %860 = vdwg.mxu0
    %v861 = vmax.f32 %v847, 0.0
    %v862 = vmax.f32 %v850, 0.0
    %v863 = vmax.f32 %v855, 0.0
    %v864 = vmax.f32 %v858, 0.0
    %v865 = vpack.c.bf16 %v862, %v861
    %v866 = vpack.c.bf16 %v864, %v863
    %867 = vmatprep.subr.bf16.mxu0 0
    %868 = vmatpush1.bf16.msra.mxu0 %v865
    %869 = vmatprep.subr.bf16.mxu0 0
    %870 = vmatpush1.bf16.msra.mxu0 %v866
    %871 = vmatprep.subr.bf16.mxu0 0
    %872 = vmatpush1.bf16.msra.mxu0 0
    %873 = vmatprep.subr.bf16.mxu0 0
    %874 = vmatpush1.bf16.msra.mxu0 0
    %875 = vmatprep.subr.bf16.mxu0 0
    %876 = vmatpush1.bf16.msra.mxu0 0
    %877 = vmatprep.subr.bf16.mxu0 0
    %878 = vmatpush1.bf16.msra.mxu0 0
    %879 = vmatprep.subr.bf16.mxu0 0
    %880 = vmatpush1.bf16.msra.mxu0 0
    %881 = vmatprep.subr.bf16.mxu0 0
    %882 = vmatpush1.bf16.msra.mxu0 0
    %883 = vmatprep.subr.bf16.mxu0 0
    %884 = vmatpush1.bf16.msra.mxu0 0
    %885 = vmatprep.subr.bf16.mxu0 0
    %886 = vmatpush1.bf16.msra.mxu0 0
    %887 = vmatprep.subr.bf16.mxu0 0
    %888 = vmatpush1.bf16.msra.mxu0 0
    %889 = vmatprep.subr.bf16.mxu0 0
    %890 = vmatpush1.bf16.msra.mxu0 0
    %891 = vmatprep.subr.bf16.mxu0 0
    %892 = vmatpush1.bf16.msra.mxu0 0
    %893 = vmatprep.subr.bf16.mxu0 0
    %894 = vmatpush1.bf16.msra.mxu0 0
    %895 = vmatprep.subr.bf16.mxu0 0
    %896 = vmatpush1.bf16.msra.mxu0 0
    %897 = vmatprep.subr.bf16.mxu0 0
    %898 = vmatpush1.bf16.msra.mxu0 0
    %899 = vmatprep.mubr.bf16.mxu0 0
    %900 = vmatmul.mubr.bf16.gmra.mrb[0].mxu0 %v292
    %v901 = vpop.f32.mrb[0].mxu0
    %v902 = vadd.f32 %v233, %v901
    %v903 = vpop.f32.mrb[0].mxu0
    %v904 = vpop.f32.mrb[0].mxu0
    %v905 = vadd.f32 %v238, %v904
    %v906 = vpop.f32.mrb[0].mxu0
    %907 = vmatprep.mubr.bf16.mxu0 0
    %908 = vmatmul.mubr.bf16.gmra.mrb[0].mxu0 %v295
    %v909 = vpop.f32.mrb[0].mxu0
    %v910 = vadd.f32 %v243, %v909
    %v911 = vpop.f32.mrb[0].mxu0
    %v912 = vpop.f32.mrb[0].mxu0
    %v913 = vadd.f32 %v248, %v912
    %v914 = vpop.f32.mrb[0].mxu0
    %915 = vmatprep.mubr.bf16.mxu0 0
    %916 = vmatmul.mubr.bf16.gmra.mrb[0].mxu0 %v298
    %v917 = vpop.f32.mrb[0].mxu0
    %v918 = vadd.f32 %v253, %v917
    %v919 = vpop.f32.mrb[0].mxu0
    %v920 = vpop.f32.mrb[0].mxu0
    %v921 = vadd.f32 %v258, %v920
    %v922 = vpop.f32.mrb[0].mxu0
    %923 = vmatprep.mubr.bf16.mxu0 0
    %924 = vmatmul.mubr.bf16.gmra.mrb[0].mxu0 %v301
    %v925 = vpop.f32.mrb[0].mxu0
    %v926 = vadd.f32 %v263, %v925
    %v927 = vpop.f32.mrb[0].mxu0
    %v928 = vpop.f32.mrb[0].mxu0
    %v929 = vadd.f32 %v268, %v928
    %v930 = vpop.f32.mrb[0].mxu0
    %931 = vdwg.mxu0
    %v932 = vmax.f32 %v902, 0.0
    %v933 = vmax.f32 %v905, 0.0
    %v934 = vmax.f32 %v910, 0.0
    %v935 = vmax.f32 %v913, 0.0
    %v936 = vmax.f32 %v918, 0.0
    %v937 = vmax.f32 %v921, 0.0
    %v938 = vmax.f32 %v926, 0.0
    %v939 = vmax.f32 %v929, 0.0
    %v940 = vmax.f32 %v752, %v932
    %v941 = vmax.f32 %v753, %v933
    %v942 = vmax.f32 %v754, %v934
    %v943 = vmax.f32 %v755, %v935
    %v944 = vmax.f32 %v756, %v936
    %v945 = vmax.f32 %v757, %v937
    %v946 = vmax.f32 %v758, %v938
    %v947 = vmax.f32 %v759, %v939
    %v948 = vld [vmem:[%s0 + $0x20] sm:$0xf]
    %v949 = vld [vmem:[%s0 + $0x24] sm:$0xf]
    %v952 = vunpack.c.l.b16 %v948
    %v953 = vunpack.c.l.b16 %v949
    %v954 = vpack.c.b16 %v953, %v952
    %956 = vmatprep.subr.bf16.mxu0 0
    %957 = vmatpush1.bf16.msra.mxu0 %v954
    %958 = vmatprep.subr.bf16.mxu0 0
    %959 = vmatpush1.bf16.msra.mxu0 0
    %960 = vmatprep.subr.bf16.mxu0 0
    %961 = vmatpush1.bf16.msra.mxu0 0
    %962 = vmatprep.subr.bf16.mxu0 0
    %963 = vmatpush1.bf16.msra.mxu0 0
    %964 = vmatprep.subr.bf16.mxu0 0
    %965 = vmatpush1.bf16.msra.mxu0 0
    %966 = vmatprep.subr.bf16.mxu0 0
    %967 = vmatpush1.bf16.msra.mxu0 0
    %968 = vmatprep.subr.bf16.mxu0 0
    %969 = vmatpush1.bf16.msra.mxu0 0
    %970 = vmatprep.subr.bf16.mxu0 0
    %971 = vmatpush1.bf16.msra.mxu0 0
    %972 = vmatprep.subr.bf16.mxu0 0
    %973 = vmatpush1.bf16.msra.mxu0 0
    %974 = vmatprep.subr.bf16.mxu0 0
    %975 = vmatpush1.bf16.msra.mxu0 0
    %976 = vmatprep.subr.bf16.mxu0 0
    %977 = vmatpush1.bf16.msra.mxu0 0
    %978 = vmatprep.subr.bf16.mxu0 0
    %979 = vmatpush1.bf16.msra.mxu0 0
    %980 = vmatprep.subr.bf16.mxu0 0
    %981 = vmatpush1.bf16.msra.mxu0 0
    %982 = vmatprep.subr.bf16.mxu0 0
    %983 = vmatpush1.bf16.msra.mxu0 0
    %984 = vmatprep.subr.bf16.mxu0 0
    %985 = vmatpush1.bf16.msra.mxu0 0
    %986 = vmatprep.subr.bf16.mxu0 0
    %987 = vmatpush1.bf16.msra.mxu0 0
    %988 = vmatprep.mubr.bf16.mxu0 0
    %989 = vmatmul.mubr.bf16.gmra.mrb[0].mxu0 %v93
    %v990 = vpop.f32.mrb[0].mxu0
    %v991 = vadd.f32 %v73, %v990
    %v992 = vpop.f32.mrb[0].mxu0
    %v993 = vpop.f32.mrb[0].mxu0
    %v994 = vadd.f32 %v78, %v993
    %v995 = vpop.f32.mrb[0].mxu0
    %996 = vdwg.mxu0
    %v997 = vmax.f32 %v991, 0.0
    %v998 = vmax.f32 %v994, 0.0
    %v999 = vpack.c.bf16 %v998, %v997
    %1000 = vmatprep.subr.bf16.mxu0 0
    %1001 = vmatpush1.bf16.msra.mxu0 %v999
    %1002 = vmatprep.subr.bf16.mxu0 0
    %1003 = vmatpush1.bf16.msra.mxu0 0
    %1004 = vmatprep.subr.bf16.mxu0 0
    %1005 = vmatpush1.bf16.msra.mxu0 0
    %1006 = vmatprep.subr.bf16.mxu0 0
    %1007 = vmatpush1.bf16.msra.mxu0 0
    %1008 = vmatprep.subr.bf16.mxu0 0
    %1009 = vmatpush1.bf16.msra.mxu0 0
    %1010 = vmatprep.subr.bf16.mxu0 0
    %1011 = vmatpush1.bf16.msra.mxu0 0
    %1012 = vmatprep.subr.bf16.mxu0 0
    %1013 = vmatpush1.bf16.msra.mxu0 0
    %1014 = vmatprep.subr.bf16.mxu0 0
    %1015 = vmatpush1.bf16.msra.mxu0 0
    %1016 = vmatprep.subr.bf16.mxu0 0
    %1017 = vmatpush1.bf16.msra.mxu0 0
    %1018 = vmatprep.subr.bf16.mxu0 0
    %1019 = vmatpush1.bf16.msra.mxu0 0
    %1020 = vmatprep.subr.bf16.mxu0 0
    %1021 = vmatpush1.bf16.msra.mxu0 0
    %1022 = vmatprep.subr.bf16.mxu0 0
    %1023 = vmatpush1.bf16.msra.mxu0 0
    %1024 = vmatprep.subr.bf16.mxu0 0
    %1025 = vmatpush1.bf16.msra.mxu0 0
    %1026 = vmatprep.subr.bf16.mxu0 0
    %1027 = vmatpush1.bf16.msra.mxu0 0
    %1028 = vmatprep.subr.bf16.mxu0 0
    %1029 = vmatpush1.bf16.msra.mxu0 0
    %1030 = vmatprep.subr.bf16.mxu0 0
    %1031 = vmatpush1.bf16.msra.mxu0 0
    %1032 = vmatprep.mubr.bf16.mxu0 0
    %1033 = vmatmul.mubr.bf16.gmra.mrb[0].mxu0 %v170
    %v1034 = vpop.f32.mrb[0].mxu0
    %v1035 = vadd.f32 %v142, %v1034
    %v1036 = vpop.f32.mrb[0].mxu0
    %v1037 = vpop.f32.mrb[0].mxu0
    %v1038 = vadd.f32 %v147, %v1037
    %v1039 = vpop.f32.mrb[0].mxu0
    %1040 = vmatprep.mubr.bf16.mxu0 0
    %1041 = vmatmul.mubr.bf16.gmra.mrb[0].mxu0 %v173
    %v1042 = vpop.f32.mrb[0].mxu0
    %v1043 = vadd.f32 %v152, %v1042
    %v1044 = vpop.f32.mrb[0].mxu0
    %v1045 = vpop.f32.mrb[0].mxu0
    %v1046 = vadd.f32 %v157, %v1045
    %v1047 = vpop.f32.mrb[0].mxu0
    %1048 = vdwg.mxu0
    %v1049 = vmax.f32 %v1035, 0.0
    %v1050 = vmax.f32 %v1038, 0.0
    %v1051 = vmax.f32 %v1043, 0.0
    %v1052 = vmax.f32 %v1046, 0.0
    %v1053 = vpack.c.bf16 %v1050, %v1049
    %v1054 = vpack.c.bf16 %v1052, %v1051
    %1055 = vmatprep.subr.bf16.mxu0 0
    %1056 = vmatpush1.bf16.msra.mxu0 %v1053
    %1057 = vmatprep.subr.bf16.mxu0 0
    %1058 = vmatpush1.bf16.msra.mxu0 %v1054
    %1059 = vmatprep.subr.bf16.mxu0 0
    %1060 = vmatpush1.bf16.msra.mxu0 0
    %1061 = vmatprep.subr.bf16.mxu0 0
    %1062 = vmatpush1.bf16.msra.mxu0 0
    %1063 = vmatprep.subr.bf16.mxu0 0
    %1064 = vmatpush1.bf16.msra.mxu0 0
    %1065 = vmatprep.subr.bf16.mxu0 0
    %1066 = vmatpush1.bf16.msra.mxu0 0
    %1067 = vmatprep.subr.bf16.mxu0 0
    %1068 = vmatpush1.bf16.msra.mxu0 0
    %1069 = vmatprep.subr.bf16.mxu0 0
    %1070 = vmatpush1.bf16.msra.mxu0 0
    %1071 = vmatprep.subr.bf16.mxu0 0
    %1072 = vmatpush1.bf16.msra.mxu0 0
    %1073 = vmatprep.subr.bf16.mxu0 0
    %1074 = vmatpush1.bf16.msra.mxu0 0
    %1075 = vmatprep.subr.bf16.mxu0 0
    %1076 = vmatpush1.bf16.msra.mxu0 0
    %1077 = vmatprep.subr.bf16.mxu0 0
    %1078 = vmatpush1.bf16.msra.mxu0 0
    %1079 = vmatprep.subr.bf16.mxu0 0
    %1080 = vmatpush1.bf16.msra.mxu0 0
    %1081 = vmatprep.subr.bf16.mxu0 0
    %1082 = vmatpush1.bf16.msra.mxu0 0
    %1083 = vmatprep.subr.bf16.mxu0 0
    %1084 = vmatpush1.bf16.msra.mxu0 0
    %1085 = vmatprep.subr.bf16.mxu0 0
    %1086 = vmatpush1.bf16.msra.mxu0 0
    %1087 = vmatprep.mubr.bf16.mxu0 0
    %1088 = vmatmul.mubr.bf16.gmra.mrb[0].mxu0 %v292
    %v1089 = vpop.f32.mrb[0].mxu0
    %v1090 = vadd.f32 %v233, %v1089
    %v1091 = vpop.f32.mrb[0].mxu0
    %v1092 = vpop.f32.mrb[0].mxu0
    %v1093 = vadd.f32 %v238, %v1092
    %v1094 = vpop.f32.mrb[0].mxu0
    %1095 = vmatprep.mubr.bf16.mxu0 0
    %1096 = vmatmul.mubr.bf16.gmra.mrb[0].mxu0 %v295
    %v1097 = vpop.f32.mrb[0].mxu0
    %v1098 = vadd.f32 %v243, %v1097
    %v1099 = vpop.f32.mrb[0].mxu0
    %v1100 = vpop.f32.mrb[0].mxu0
    %v1101 = vadd.f32 %v248, %v1100
    %v1102 = vpop.f32.mrb[0].mxu0
    %1103 = vmatprep.mubr.bf16.mxu0 0
    %1104 = vmatmul.mubr.bf16.gmra.mrb[0].mxu0 %v298
    %v1105 = vpop.f32.mrb[0].mxu0
    %v1106 = vadd.f32 %v253, %v1105
    %v1107 = vpop.f32.mrb[0].mxu0
    %v1108 = vpop.f32.mrb[0].mxu0
    %v1109 = vadd.f32 %v258, %v1108
    %v1110 = vpop.f32.mrb[0].mxu0
    %1111 = vmatprep.mubr.bf16.mxu0 0
    %1112 = vmatmul.mubr.bf16.gmra.mrb[0].mxu0 %v301
    %v1113 = vpop.f32.mrb[0].mxu0
    %v1114 = vadd.f32 %v263, %v1113
    %v1115 = vpop.f32.mrb[0].mxu0
    %v1116 = vpop.f32.mrb[0].mxu0
    %v1117 = vadd.f32 %v268, %v1116
    %v1118 = vpop.f32.mrb[0].mxu0
    %1119 = vdwg.mxu0
    %v1120 = vmax.f32 %v1090, 0.0
    %v1121 = vmax.f32 %v1093, 0.0
    %v1122 = vmax.f32 %v1098, 0.0
    %v1123 = vmax.f32 %v1101, 0.0
    %v1124 = vmax.f32 %v1106, 0.0
    %v1125 = vmax.f32 %v1109, 0.0
    %v1126 = vmax.f32 %v1114, 0.0
    %v1127 = vmax.f32 %v1117, 0.0
    %v1128 = vmax.f32 %v940, %v1120
    %v1129 = vmax.f32 %v941, %v1121
    %v1130 = vmax.f32 %v942, %v1122
    %v1131 = vmax.f32 %v943, %v1123
    %v1132 = vmax.f32 %v944, %v1124
    %v1133 = vmax.f32 %v945, %v1125
    %v1134 = vmax.f32 %v946, %v1126
    %v1135 = vmax.f32 %v947, %v1127
    %v1136 = vld [vmem:[%s0 + $0x28] sm:$0xf]
    %v1137 = vld [vmem:[%s0 + $0x2c] sm:$0xf]
    %v1140 = vunpack.c.l.b16 %v1136
    %v1141 = vunpack.c.l.b16 %v1137
    %v1142 = vpack.c.b16 %v1141, %v1140
    %1144 = vmatprep.subr.bf16.mxu0 0
    %1145 = vmatpush1.bf16.msra.mxu0 %v1142
    %1146 = vmatprep.subr.bf16.mxu0 0
    %1147 = vmatpush1.bf16.msra.mxu0 0
    %1148 = vmatprep.subr.bf16.mxu0 0
    %1149 = vmatpush1.bf16.msra.mxu0 0
    %1150 = vmatprep.subr.bf16.mxu0 0
    %1151 = vmatpush1.bf16.msra.mxu0 0
    %1152 = vmatprep.subr.bf16.mxu0 0
    %1153 = vmatpush1.bf16.msra.mxu0 0
    %1154 = vmatprep.subr.bf16.mxu0 0
    %1155 = vmatpush1.bf16.msra.mxu0 0
    %1156 = vmatprep.subr.bf16.mxu0 0
    %1157 = vmatpush1.bf16.msra.mxu0 0
    %1158 = vmatprep.subr.bf16.mxu0 0
    %1159 = vmatpush1.bf16.msra.mxu0 0
    %1160 = vmatprep.subr.bf16.mxu0 0
    %1161 = vmatpush1.bf16.msra.mxu0 0
    %1162 = vmatprep.subr.bf16.mxu0 0
    %1163 = vmatpush1.bf16.msra.mxu0 0
    %1164 = vmatprep.subr.bf16.mxu0 0
    %1165 = vmatpush1.bf16.msra.mxu0 0
    %1166 = vmatprep.subr.bf16.mxu0 0
    %1167 = vmatpush1.bf16.msra.mxu0 0
    %1168 = vmatprep.subr.bf16.mxu0 0
    %1169 = vmatpush1.bf16.msra.mxu0 0
    %1170 = vmatprep.subr.bf16.mxu0 0
    %1171 = vmatpush1.bf16.msra.mxu0 0
    %1172 = vmatprep.subr.bf16.mxu0 0
    %1173 = vmatpush1.bf16.msra.mxu0 0
    %1174 = vmatprep.subr.bf16.mxu0 0
    %1175 = vmatpush1.bf16.msra.mxu0 0
    %1176 = vmatprep.mubr.bf16.mxu0 0
    %1177 = vmatmul.mubr.bf16.gmra.mrb[0].mxu0 %v93
    %v1178 = vpop.f32.mrb[0].mxu0
    %v1179 = vadd.f32 %v73, %v1178
    %v1180 = vpop.f32.mrb[0].mxu0
    %v1181 = vpop.f32.mrb[0].mxu0
    %v1182 = vadd.f32 %v78, %v1181
    %v1183 = vpop.f32.mrb[0].mxu0
    %1184 = vdwg.mxu0
    %v1185 = vmax.f32 %v1179, 0.0
    %v1186 = vmax.f32 %v1182, 0.0
    %v1187 = vpack.c.bf16 %v1186, %v1185
    %1188 = vmatprep.subr.bf16.mxu0 0
    %1189 = vmatpush1.bf16.msra.mxu0 %v1187
    %1190 = vmatprep.subr.bf16.mxu0 0
    %1191 = vmatpush1.bf16.msra.mxu0 0
    %1192 = vmatprep.subr.bf16.mxu0 0
    %1193 = vmatpush1.bf16.msra.mxu0 0
    %1194 = vmatprep.subr.bf16.mxu0 0
    %1195 = vmatpush1.bf16.msra.mxu0 0
    %1196 = vmatprep.subr.bf16.mxu0 0
    %1197 = vmatpush1.bf16.msra.mxu0 0
    %1198 = vmatprep.subr.bf16.mxu0 0
    %1199 = vmatpush1.bf16.msra.mxu0 0
    %1200 = vmatprep.subr.bf16.mxu0 0
    %1201 = vmatpush1.bf16.msra.mxu0 0
    %1202 = vmatprep.subr.bf16.mxu0 0
    %1203 = vmatpush1.bf16.msra.mxu0 0
    %1204 = vmatprep.subr.bf16.mxu0 0
    %1205 = vmatpush1.bf16.msra.mxu0 0
    %1206 = vmatprep.subr.bf16.mxu0 0
    %1207 = vmatpush1.bf16.msra.mxu0 0
    %1208 = vmatprep.subr.bf16.mxu0 0
    %1209 = vmatpush1.bf16.msra.mxu0 0
    %1210 = vmatprep.subr.bf16.mxu0 0
    %1211 = vmatpush1.bf16.msra.mxu0 0
    %1212 = vmatprep.subr.bf16.mxu0 0
    %1213 = vmatpush1.bf16.msra.mxu0 0
    %1214 = vmatprep.subr.bf16.mxu0 0
    %1215 = vmatpush1.bf16.msra.mxu0 0
    %1216 = vmatprep.subr.bf16.mxu0 0
    %1217 = vmatpush1.bf16.msra.mxu0 0
    %1218 = vmatprep.subr.bf16.mxu0 0
    %1219 = vmatpush1.bf16.msra.mxu0 0
    %1220 = vmatprep.mubr.bf16.mxu0 0
    %1221 = vmatmul.mubr.bf16.gmra.mrb[0].mxu0 %v170
    %v1222 = vpop.f32.mrb[0].mxu0
    %v1223 = vadd.f32 %v142, %v1222
    %v1224 = vpop.f32.mrb[0].mxu0
    %v1225 = vpop.f32.mrb[0].mxu0
    %v1226 = vadd.f32 %v147, %v1225
    %v1227 = vpop.f32.mrb[0].mxu0
    %1228 = vmatprep.mubr.bf16.mxu0 0
    %1229 = vmatmul.mubr.bf16.gmra.mrb[0].mxu0 %v173
    %v1230 = vpop.f32.mrb[0].mxu0
    %v1231 = vadd.f32 %v152, %v1230
    %v1232 = vpop.f32.mrb[0].mxu0
    %v1233 = vpop.f32.mrb[0].mxu0
    %v1234 = vadd.f32 %v157, %v1233
    %v1235 = vpop.f32.mrb[0].mxu0
    %1236 = vdwg.mxu0
    %v1237 = vmax.f32 %v1223, 0.0
    %v1238 = vmax.f32 %v1226, 0.0
    %v1239 = vmax.f32 %v1231, 0.0
    %v1240 = vmax.f32 %v1234, 0.0
    %v1241 = vpack.c.bf16 %v1238, %v1237
    %v1242 = vpack.c.bf16 %v1240, %v1239
    %1243 = vmatprep.subr.bf16.mxu0 0
    %1244 = vmatpush1.bf16.msra.mxu0 %v1241
    %1245 = vmatprep.subr.bf16.mxu0 0
    %1246 = vmatpush1.bf16.msra.mxu0 %v1242
    %1247 = vmatprep.subr.bf16.mxu0 0
    %1248 = vmatpush1.bf16.msra.mxu0 0
    %1249 = vmatprep.subr.bf16.mxu0 0
    %1250 = vmatpush1.bf16.msra.mxu0 0
    %1251 = vmatprep.subr.bf16.mxu0 0
    %1252 = vmatpush1.bf16.msra.mxu0 0
    %1253 = vmatprep.subr.bf16.mxu0 0
    %1254 = vmatpush1.bf16.msra.mxu0 0
    %1255 = vmatprep.subr.bf16.mxu0 0
    %1256 = vmatpush1.bf16.msra.mxu0 0
    %1257 = vmatprep.subr.bf16.mxu0 0
    %1258 = vmatpush1.bf16.msra.mxu0 0
    %1259 = vmatprep.subr.bf16.mxu0 0
    %1260 = vmatpush1.bf16.msra.mxu0 0
    %1261 = vmatprep.subr.bf16.mxu0 0
    %1262 = vmatpush1.bf16.msra.mxu0 0
    %1263 = vmatprep.subr.bf16.mxu0 0
    %1264 = vmatpush1.bf16.msra.mxu0 0
    %1265 = vmatprep.subr.bf16.mxu0 0
    %1266 = vmatpush1.bf16.msra.mxu0 0
    %1267 = vmatprep.subr.bf16.mxu0 0
    %1268 = vmatpush1.bf16.msra.mxu0 0
    %1269 = vmatprep.subr.bf16.mxu0 0
    %1270 = vmatpush1.bf16.msra.mxu0 0
    %1271 = vmatprep.subr.bf16.mxu0 0
    %1272 = vmatpush1.bf16.msra.mxu0 0
    %1273 = vmatprep.subr.bf16.mxu0 0
    %1274 = vmatpush1.bf16.msra.mxu0 0
    %1275 = vmatprep.mubr.bf16.mxu0 0
    %1276 = vmatmul.mubr.bf16.gmra.mrb[0].mxu0 %v292
    %v1277 = vpop.f32.mrb[0].mxu0
    %v1278 = vadd.f32 %v233, %v1277
    %v1279 = vpop.f32.mrb[0].mxu0
    %v1280 = vpop.f32.mrb[0].mxu0
    %v1281 = vadd.f32 %v238, %v1280
    %v1282 = vpop.f32.mrb[0].mxu0
    %1283 = vmatprep.mubr.bf16.mxu0 0
    %1284 = vmatmul.mubr.bf16.gmra.mrb[0].mxu0 %v295
    %v1285 = vpop.f32.mrb[0].mxu0
    %v1286 = vadd.f32 %v243, %v1285
    %v1287 = vpop.f32.mrb[0].mxu0
    %v1288 = vpop.f32.mrb[0].mxu0
    %v1289 = vadd.f32 %v248, %v1288
    %v1290 = vpop.f32.mrb[0].mxu0
    %1291 = vmatprep.mubr.bf16.mxu0 0
    %1292 = vmatmul.mubr.bf16.gmra.mrb[0].mxu0 %v298
    %v1293 = vpop.f32.mrb[0].mxu0
    %v1294 = vadd.f32 %v253, %v1293
    %v1295 = vpop.f32.mrb[0].mxu0
    %v1296 = vpop.f32.mrb[0].mxu0
    %v1297 = vadd.f32 %v258, %v1296
    %v1298 = vpop.f32.mrb[0].mxu0
    %1299 = vmatprep.mubr.bf16.mxu0 0
    %1300 = vmatmul.mubr.bf16.gmra.mrb[0].mxu0 %v301
    %v1301 = vpop.f32.mrb[0].mxu0
    %v1302 = vadd.f32 %v263, %v1301
    %v1303 = vpop.f32.mrb[0].mxu0
    %v1304 = vpop.f32.mrb[0].mxu0
    %v1305 = vadd.f32 %v268, %v1304
    %v1306 = vpop.f32.mrb[0].mxu0
    %1307 = vdwg.mxu0
    %v1308 = vmax.f32 %v1278, 0.0
    %v1309 = vmax.f32 %v1281, 0.0
    %v1310 = vmax.f32 %v1286, 0.0
    %v1311 = vmax.f32 %v1289, 0.0
    %v1312 = vmax.f32 %v1294, 0.0
    %v1313 = vmax.f32 %v1297, 0.0
    %v1314 = vmax.f32 %v1302, 0.0
    %v1315 = vmax.f32 %v1305, 0.0
    %v1316 = vmax.f32 %v1128, %v1308
    %v1317 = vmax.f32 %v1129, %v1309
    %v1318 = vmax.f32 %v1130, %v1310
    %v1319 = vmax.f32 %v1131, %v1311
    %v1320 = vmax.f32 %v1132, %v1312
    %v1321 = vmax.f32 %v1133, %v1313
    %v1322 = vmax.f32 %v1134, %v1314
    %v1323 = vmax.f32 %v1135, %v1315
    %v1324 = vld [vmem:[%s0 + $0x30] sm:$0xf]
    %v1325 = vld [vmem:[%s0 + $0x34] sm:$0xf]
    %v1328 = vunpack.c.l.b16 %v1324
    %v1329 = vunpack.c.l.b16 %v1325
    %v1330 = vpack.c.b16 %v1329, %v1328
    %1332 = vmatprep.subr.bf16.mxu0 0
    %1333 = vmatpush1.bf16.msra.mxu0 %v1330
    %1334 = vmatprep.subr.bf16.mxu0 0
    %1335 = vmatpush1.bf16.msra.mxu0 0
    %1336 = vmatprep.subr.bf16.mxu0 0
    %1337 = vmatpush1.bf16.msra.mxu0 0
    %1338 = vmatprep.subr.bf16.mxu0 0
    %1339 = vmatpush1.bf16.msra.mxu0 0
    %1340 = vmatprep.subr.bf16.mxu0 0
    %1341 = vmatpush1.bf16.msra.mxu0 0
    %1342 = vmatprep.subr.bf16.mxu0 0
    %1343 = vmatpush1.bf16.msra.mxu0 0
    %1344 = vmatprep.subr.bf16.mxu0 0
    %1345 = vmatpush1.bf16.msra.mxu0 0
    %1346 = vmatprep.subr.bf16.mxu0 0
    %1347 = vmatpush1.bf16.msra.mxu0 0
    %1348 = vmatprep.subr.bf16.mxu0 0
    %1349 = vmatpush1.bf16.msra.mxu0 0
    %1350 = vmatprep.subr.bf16.mxu0 0
    %1351 = vmatpush1.bf16.msra.mxu0 0
    %1352 = vmatprep.subr.bf16.mxu0 0
    %1353 = vmatpush1.bf16.msra.mxu0 0
    %1354 = vmatprep.subr.bf16.mxu0 0
    %1355 = vmatpush1.bf16.msra.mxu0 0
    %1356 = vmatprep.subr.bf16.mxu0 0
    %1357 = vmatpush1.bf16.msra.mxu0 0
    %1358 = vmatprep.subr.bf16.mxu0 0
    %1359 = vmatpush1.bf16.msra.mxu0 0
    %1360 = vmatprep.subr.bf16.mxu0 0
    %1361 = vmatpush1.bf16.msra.mxu0 0
    %1362 = vmatprep.subr.bf16.mxu0 0
    %1363 = vmatpush1.bf16.msra.mxu0 0
    %1364 = vmatprep.mubr.bf16.mxu0 0
    %1365 = vmatmul.mubr.bf16.gmra.mrb[0].mxu0 %v93
    %v1366 = vpop.f32.mrb[0].mxu0
    %v1367 = vadd.f32 %v73, %v1366
    %v1368 = vpop.f32.mrb[0].mxu0
    %v1369 = vpop.f32.mrb[0].mxu0
    %v1370 = vadd.f32 %v78, %v1369
    %v1371 = vpop.f32.mrb[0].mxu0
    %1372 = vdwg.mxu0
    %v1373 = vmax.f32 %v1367, 0.0
    %v1374 = vmax.f32 %v1370, 0.0
    %v1375 = vpack.c.bf16 %v1374, %v1373
    %1376 = vmatprep.subr.bf16.mxu0 0
    %1377 = vmatpush1.bf16.msra.mxu0 %v1375
    %1378 = vmatprep.subr.bf16.mxu0 0
    %1379 = vmatpush1.bf16.msra.mxu0 0
    %1380 = vmatprep.subr.bf16.mxu0 0
    %1381 = vmatpush1.bf16.msra.mxu0 0
    %1382 = vmatprep.subr.bf16.mxu0 0
    %1383 = vmatpush1.bf16.msra.mxu0 0
    %1384 = vmatprep.subr.bf16.mxu0 0
    %1385 = vmatpush1.bf16.msra.mxu0 0
    %1386 = vmatprep.subr.bf16.mxu0 0
    %1387 = vmatpush1.bf16.msra.mxu0 0
    %1388 = vmatprep.subr.bf16.mxu0 0
    %1389 = vmatpush1.bf16.msra.mxu0 0
    %1390 = vmatprep.subr.bf16.mxu0 0
    %1391 = vmatpush1.bf16.msra.mxu0 0
    %1392 = vmatprep.subr.bf16.mxu0 0
    %1393 = vmatpush1.bf16.msra.mxu0 0
    %1394 = vmatprep.subr.bf16.mxu0 0
    %1395 = vmatpush1.bf16.msra.mxu0 0
    %1396 = vmatprep.subr.bf16.mxu0 0
    %1397 = vmatpush1.bf16.msra.mxu0 0
    %1398 = vmatprep.subr.bf16.mxu0 0
    %1399 = vmatpush1.bf16.msra.mxu0 0
    %1400 = vmatprep.subr.bf16.mxu0 0
    %1401 = vmatpush1.bf16.msra.mxu0 0
    %1402 = vmatprep.subr.bf16.mxu0 0
    %1403 = vmatpush1.bf16.msra.mxu0 0
    %1404 = vmatprep.subr.bf16.mxu0 0
    %1405 = vmatpush1.bf16.msra.mxu0 0
    %1406 = vmatprep.subr.bf16.mxu0 0
    %1407 = vmatpush1.bf16.msra.mxu0 0
    %1408 = vmatprep.mubr.bf16.mxu0 0
    %1409 = vmatmul.mubr.bf16.gmra.mrb[0].mxu0 %v170
    %v1410 = vpop.f32.mrb[0].mxu0
    %v1411 = vadd.f32 %v142, %v1410
    %v1412 = vpop.f32.mrb[0].mxu0
    %v1413 = vpop.f32.mrb[0].mxu0
    %v1414 = vadd.f32 %v147, %v1413
    %v1415 = vpop.f32.mrb[0].mxu0
    %1416 = vmatprep.mubr.bf16.mxu0 0
    %1417 = vmatmul.mubr.bf16.gmra.mrb[0].mxu0 %v173
    %v1418 = vpop.f32.mrb[0].mxu0
    %v1419 = vadd.f32 %v152, %v1418
    %v1420 = vpop.f32.mrb[0].mxu0
    %v1421 = vpop.f32.mrb[0].mxu0
    %v1422 = vadd.f32 %v157, %v1421
    %v1423 = vpop.f32.mrb[0].mxu0
    %1424 = vdwg.mxu0
    %v1425 = vmax.f32 %v1411, 0.0
    %v1426 = vmax.f32 %v1414, 0.0
    %v1427 = vmax.f32 %v1419, 0.0
    %v1428 = vmax.f32 %v1422, 0.0
    %v1429 = vpack.c.bf16 %v1426, %v1425
    %v1430 = vpack.c.bf16 %v1428, %v1427
    %1431 = vmatprep.subr.bf16.mxu0 0
    %1432 = vmatpush1.bf16.msra.mxu0 %v1429
    %1433 = vmatprep.subr.bf16.mxu0 0
    %1434 = vmatpush1.bf16.msra.mxu0 %v1430
    %1435 = vmatprep.subr.bf16.mxu0 0
    %1436 = vmatpush1.bf16.msra.mxu0 0
    %1437 = vmatprep.subr.bf16.mxu0 0
    %1438 = vmatpush1.bf16.msra.mxu0 0
    %1439 = vmatprep.subr.bf16.mxu0 0
    %1440 = vmatpush1.bf16.msra.mxu0 0
    %1441 = vmatprep.subr.bf16.mxu0 0
    %1442 = vmatpush1.bf16.msra.mxu0 0
    %1443 = vmatprep.subr.bf16.mxu0 0
    %1444 = vmatpush1.bf16.msra.mxu0 0
    %1445 = vmatprep.subr.bf16.mxu0 0
    %1446 = vmatpush1.bf16.msra.mxu0 0
    %1447 = vmatprep.subr.bf16.mxu0 0
    %1448 = vmatpush1.bf16.msra.mxu0 0
    %1449 = vmatprep.subr.bf16.mxu0 0
    %1450 = vmatpush1.bf16.msra.mxu0 0
    %1451 = vmatprep.subr.bf16.mxu0 0
    %1452 = vmatpush1.bf16.msra.mxu0 0
    %1453 = vmatprep.subr.bf16.mxu0 0
    %1454 = vmatpush1.bf16.msra.mxu0 0
    %1455 = vmatprep.subr.bf16.mxu0 0
    %1456 = vmatpush1.bf16.msra.mxu0 0
    %1457 = vmatprep.subr.bf16.mxu0 0
    %1458 = vmatpush1.bf16.msra.mxu0 0
    %1459 = vmatprep.subr.bf16.mxu0 0
    %1460 = vmatpush1.bf16.msra.mxu0 0
    %1461 = vmatprep.subr.bf16.mxu0 0
    %1462 = vmatpush1.bf16.msra.mxu0 0
    %1463 = vmatprep.mubr.bf16.mxu0 0
    %1464 = vmatmul.mubr.bf16.gmra.mrb[0].mxu0 %v292
    %v1465 = vpop.f32.mrb[0].mxu0
    %v1466 = vadd.f32 %v233, %v1465
    %v1467 = vpop.f32.mrb[0].mxu0
    %v1468 = vpop.f32.mrb[0].mxu0
    %v1469 = vadd.f32 %v238, %v1468
    %v1470 = vpop.f32.mrb[0].mxu0
    %1471 = vmatprep.mubr.bf16.mxu0 0
    %1472 = vmatmul.mubr.bf16.gmra.mrb[0].mxu0 %v295
    %v1473 = vpop.f32.mrb[0].mxu0
    %v1474 = vadd.f32 %v243, %v1473
    %v1475 = vpop.f32.mrb[0].mxu0
    %v1476 = vpop.f32.mrb[0].mxu0
    %v1477 = vadd.f32 %v248, %v1476
    %v1478 = vpop.f32.mrb[0].mxu0
    %1479 = vmatprep.mubr.bf16.mxu0 0
    %1480 = vmatmul.mubr.bf16.gmra.mrb[0].mxu0 %v298
    %v1481 = vpop.f32.mrb[0].mxu0
    %v1482 = vadd.f32 %v253, %v1481
    %v1483 = vpop.f32.mrb[0].mxu0
    %v1484 = vpop.f32.mrb[0].mxu0
    %v1485 = vadd.f32 %v258, %v1484
    %v1486 = vpop.f32.mrb[0].mxu0
    %1487 = vmatprep.mubr.bf16.mxu0 0
    %1488 = vmatmul.mubr.bf16.gmra.mrb[0].mxu0 %v301
    %v1489 = vpop.f32.mrb[0].mxu0
    %v1490 = vadd.f32 %v263, %v1489
    %v1491 = vpop.f32.mrb[0].mxu0
    %v1492 = vpop.f32.mrb[0].mxu0
    %v1493 = vadd.f32 %v268, %v1492
    %v1494 = vpop.f32.mrb[0].mxu0
    %1495 = vdwg.mxu0
    %v1496 = vmax.f32 %v1466, 0.0
    %v1497 = vmax.f32 %v1469, 0.0
    %v1498 = vmax.f32 %v1474, 0.0
    %v1499 = vmax.f32 %v1477, 0.0
    %v1500 = vmax.f32 %v1482, 0.0
    %v1501 = vmax.f32 %v1485, 0.0
    %v1502 = vmax.f32 %v1490, 0.0
    %v1503 = vmax.f32 %v1493, 0.0
    %v1504 = vmax.f32 %v1316, %v1496
    %v1505 = vmax.f32 %v1317, %v1497
    %v1506 = vmax.f32 %v1318, %v1498
    %v1507 = vmax.f32 %v1319, %v1499
    %v1508 = vmax.f32 %v1320, %v1500
    %v1509 = vmax.f32 %v1321, %v1501
    %v1510 = vmax.f32 %v1322, %v1502
    %v1511 = vmax.f32 %v1323, %v1503
    %v1512 = vld [vmem:[%s0 + $0x38] sm:$0xf]
    %v1513 = vld [vmem:[%s0 + $0x3c] sm:$0xf]
    %v1516 = vunpack.c.l.b16 %v1512
    %v1517 = vunpack.c.l.b16 %v1513
    %v1518 = vpack.c.b16 %v1517, %v1516
    %1520 = vmatprep.subr.bf16.mxu0 0
    %1521 = vmatpush1.bf16.msra.mxu0 %v1518
    %1522 = vmatprep.subr.bf16.mxu0 0
    %1523 = vmatpush1.bf16.msra.mxu0 0
    %1524 = vmatprep.subr.bf16.mxu0 0
    %1525 = vmatpush1.bf16.msra.mxu0 0
    %1526 = vmatprep.subr.bf16.mxu0 0
    %1527 = vmatpush1.bf16.msra.mxu0 0
    %1528 = vmatprep.subr.bf16.mxu0 0
    %1529 = vmatpush1.bf16.msra.mxu0 0
    %1530 = vmatprep.subr.bf16.mxu0 0
    %1531 = vmatpush1.bf16.msra.mxu0 0
    %1532 = vmatprep.subr.bf16.mxu0 0
    %1533 = vmatpush1.bf16.msra.mxu0 0
    %1534 = vmatprep.subr.bf16.mxu0 0
    %1535 = vmatpush1.bf16.msra.mxu0 0
    %1536 = vmatprep.subr.bf16.mxu0 0
    %1537 = vmatpush1.bf16.msra.mxu0 0
    %1538 = vmatprep.subr.bf16.mxu0 0
    %1539 = vmatpush1.bf16.msra.mxu0 0
    %1540 = vmatprep.subr.bf16.mxu0 0
    %1541 = vmatpush1.bf16.msra.mxu0 0
    %1542 = vmatprep.subr.bf16.mxu0 0
    %1543 = vmatpush1.bf16.msra.mxu0 0
    %1544 = vmatprep.subr.bf16.mxu0 0
    %1545 = vmatpush1.bf16.msra.mxu0 0
    %1546 = vmatprep.subr.bf16.mxu0 0
    %1547 = vmatpush1.bf16.msra.mxu0 0
    %1548 = vmatprep.subr.bf16.mxu0 0
    %1549 = vmatpush1.bf16.msra.mxu0 0
    %1550 = vmatprep.subr.bf16.mxu0 0
    %1551 = vmatpush1.bf16.msra.mxu0 0
    %1552 = vmatprep.mubr.bf16.mxu0 0
    %1553 = vmatmul.mubr.bf16.gmra.mrb[0].mxu0 %v93
    %v1554 = vpop.f32.mrb[0].mxu0
    %v1555 = vadd.f32 %v73, %v1554
    %v1556 = vpop.f32.mrb[0].mxu0
    %v1557 = vpop.f32.mrb[0].mxu0
    %v1558 = vadd.f32 %v78, %v1557
    %v1559 = vpop.f32.mrb[0].mxu0
    %1560 = vdwg.mxu0
    %v1561 = vmax.f32 %v1555, 0.0
    %v1562 = vmax.f32 %v1558, 0.0
    %v1563 = vpack.c.bf16 %v1562, %v1561
    %1564 = vmatprep.subr.bf16.mxu0 0
    %1565 = vmatpush1.bf16.msra.mxu0 %v1563
    %1566 = vmatprep.subr.bf16.mxu0 0
    %1567 = vmatpush1.bf16.msra.mxu0 0
    %1568 = vmatprep.subr.bf16.mxu0 0
    %1569 = vmatpush1.bf16.msra.mxu0 0
    %1570 = vmatprep.subr.bf16.mxu0 0
    %1571 = vmatpush1.bf16.msra.mxu0 0
    %1572 = vmatprep.subr.bf16.mxu0 0
    %1573 = vmatpush1.bf16.msra.mxu0 0
    %1574 = vmatprep.subr.bf16.mxu0 0
    %1575 = vmatpush1.bf16.msra.mxu0 0
    %1576 = vmatprep.subr.bf16.mxu0 0
    %1577 = vmatpush1.bf16.msra.mxu0 0
    %1578 = vmatprep.subr.bf16.mxu0 0
    %1579 = vmatpush1.bf16.msra.mxu0 0
    %1580 = vmatprep.subr.bf16.mxu0 0
    %1581 = vmatpush1.bf16.msra.mxu0 0
    %1582 = vmatprep.subr.bf16.mxu0 0
    %1583 = vmatpush1.bf16.msra.mxu0 0
    %1584 = vmatprep.subr.bf16.mxu0 0
    %1585 = vmatpush1.bf16.msra.mxu0 0
    %1586 = vmatprep.subr.bf16.mxu0 0
    %1587 = vmatpush1.bf16.msra.mxu0 0
    %1588 = vmatprep.subr.bf16.mxu0 0
    %1589 = vmatpush1.bf16.msra.mxu0 0
    %1590 = vmatprep.subr.bf16.mxu0 0
    %1591 = vmatpush1.bf16.msra.mxu0 0
    %1592 = vmatprep.subr.bf16.mxu0 0
    %1593 = vmatpush1.bf16.msra.mxu0 0
    %1594 = vmatprep.subr.bf16.mxu0 0
    %1595 = vmatpush1.bf16.msra.mxu0 0
    %1596 = vmatprep.mubr.bf16.mxu0 0
    %1597 = vmatmul.mubr.bf16.gmra.mrb[0].mxu0 %v170
    %v1598 = vpop.f32.mrb[0].mxu0
    %v1599 = vadd.f32 %v142, %v1598
    %v1600 = vpop.f32.mrb[0].mxu0
    %v1601 = vpop.f32.mrb[0].mxu0
    %v1602 = vadd.f32 %v147, %v1601
    %v1603 = vpop.f32.mrb[0].mxu0
    %1604 = vmatprep.mubr.bf16.mxu0 0
    %1605 = vmatmul.mubr.bf16.gmra.mrb[0].mxu0 %v173
    %v1606 = vpop.f32.mrb[0].mxu0
    %v1607 = vadd.f32 %v152, %v1606
    %v1608 = vpop.f32.mrb[0].mxu0
    %v1609 = vpop.f32.mrb[0].mxu0
    %v1610 = vadd.f32 %v157, %v1609
    %v1611 = vpop.f32.mrb[0].mxu0
    %1612 = vdwg.mxu0
    %v1613 = vmax.f32 %v1599, 0.0
    %v1614 = vmax.f32 %v1602, 0.0
    %v1615 = vmax.f32 %v1607, 0.0
    %v1616 = vmax.f32 %v1610, 0.0
    %v1617 = vpack.c.bf16 %v1614, %v1613
    %v1618 = vpack.c.bf16 %v1616, %v1615
    %1619 = vmatprep.subr.bf16.mxu0 0
    %1620 = vmatpush1.bf16.msra.mxu0 %v1617
    %1621 = vmatprep.subr.bf16.mxu0 0
    %1622 = vmatpush1.bf16.msra.mxu0 %v1618
    %1623 = vmatprep.subr.bf16.mxu0 0
    %1624 = vmatpush1.bf16.msra.mxu0 0
    %1625 = vmatprep.subr.bf16.mxu0 0
    %1626 = vmatpush1.bf16.msra.mxu0 0
    %1627 = vmatprep.subr.bf16.mxu0 0
    %1628 = vmatpush1.bf16.msra.mxu0 0
    %1629 = vmatprep.subr.bf16.mxu0 0
    %1630 = vmatpush1.bf16.msra.mxu0 0
    %1631 = vmatprep.subr.bf16.mxu0 0
    %1632 = vmatpush1.bf16.msra.mxu0 0
    %1633 = vmatprep.subr.bf16.mxu0 0
    %1634 = vmatpush1.bf16.msra.mxu0 0
    %1635 = vmatprep.subr.bf16.mxu0 0
    %1636 = vmatpush1.bf16.msra.mxu0 0
    %1637 = vmatprep.subr.bf16.mxu0 0
    %1638 = vmatpush1.bf16.msra.mxu0 0
    %1639 = vmatprep.subr.bf16.mxu0 0
    %1640 = vmatpush1.bf16.msra.mxu0 0
    %1641 = vmatprep.subr.bf16.mxu0 0
    %1642 = vmatpush1.bf16.msra.mxu0 0
    %1643 = vmatprep.subr.bf16.mxu0 0
    %1644 = vmatpush1.bf16.msra.mxu0 0
    %1645 = vmatprep.subr.bf16.mxu0 0
    %1646 = vmatpush1.bf16.msra.mxu0 0
    %1647 = vmatprep.subr.bf16.mxu0 0
    %1648 = vmatpush1.bf16.msra.mxu0 0
    %1649 = vmatprep.subr.bf16.mxu0 0
    %1650 = vmatpush1.bf16.msra.mxu0 0
    %1651 = vmatprep.mubr.bf16.mxu0 0
    %1652 = vmatmul.mubr.bf16.gmra.mrb[0].mxu0 %v292
    %v1653 = vpop.f32.mrb[0].mxu0
    %v1654 = vadd.f32 %v233, %v1653
    %v1655 = vpop.f32.mrb[0].mxu0
    %v1656 = vpop.f32.mrb[0].mxu0
    %v1657 = vadd.f32 %v238, %v1656
    %v1658 = vpop.f32.mrb[0].mxu0
    %1659 = vmatprep.mubr.bf16.mxu0 0
    %1660 = vmatmul.mubr.bf16.gmra.mrb[0].mxu0 %v295
    %v1661 = vpop.f32.mrb[0].mxu0
    %v1662 = vadd.f32 %v243, %v1661
    %v1663 = vpop.f32.mrb[0].mxu0
    %v1664 = vpop.f32.mrb[0].mxu0
    %v1665 = vadd.f32 %v248, %v1664
    %v1666 = vpop.f32.mrb[0].mxu0
    %1667 = vmatprep.mubr.bf16.mxu0 0
    %1668 = vmatmul.mubr.bf16.gmra.mrb[0].mxu0 %v298
    %v1669 = vpop.f32.mrb[0].mxu0
    %v1670 = vadd.f32 %v253, %v1669
    %v1671 = vpop.f32.mrb[0].mxu0
    %v1672 = vpop.f32.mrb[0].mxu0
    %v1673 = vadd.f32 %v258, %v1672
    %v1674 = vpop.f32.mrb[0].mxu0
    %1675 = vmatprep.mubr.bf16.mxu0 0
    %1676 = vmatmul.mubr.bf16.gmra.mrb[0].mxu0 %v301
    %v1677 = vpop.f32.mrb[0].mxu0
    %v1678 = vadd.f32 %v263, %v1677
    %v1679 = vpop.f32.mrb[0].mxu0
    %v1680 = vpop.f32.mrb[0].mxu0
    %v1681 = vadd.f32 %v268, %v1680
    %v1682 = vpop.f32.mrb[0].mxu0
    %1683 = vdwg.mxu0
    %v1684 = vmax.f32 %v1654, 0.0
    %v1685 = vmax.f32 %v1657, 0.0
    %v1686 = vmax.f32 %v1662, 0.0
    %v1687 = vmax.f32 %v1665, 0.0
    %v1688 = vmax.f32 %v1670, 0.0
    %v1689 = vmax.f32 %v1673, 0.0
    %v1690 = vmax.f32 %v1678, 0.0
    %v1691 = vmax.f32 %v1681, 0.0
    %v1692 = vmax.f32 %v1504, %v1684
    %v1693 = vmax.f32 %v1505, %v1685
    %v1694 = vmax.f32 %v1506, %v1686
    %v1695 = vmax.f32 %v1507, %v1687
    %v1696 = vmax.f32 %v1508, %v1688
    %v1697 = vmax.f32 %v1509, %v1689
    %v1698 = vmax.f32 %v1510, %v1690
    %v1699 = vmax.f32 %v1511, %v1691
    %v1700 = vpack.c.bf16 %v1693, %v1692
    %v1701 = vpack.c.bf16 %v1695, %v1694
    %v1702 = vpack.c.bf16 %v1697, %v1696
    %v1703 = vpack.c.bf16 %v1699, %v1698
    %1705 = vset.pattern.permute.xlu0 0
    %1706 = vperm.xlu0 %1705, %v55
    %v1707 = vpop.permute.xlu0 %1706
    %1710 = vset.pattern.permute.xlu0 0
    %1711 = vperm.xlu0 %1710, %v56
    %v1712 = vpop.permute.xlu0 %1711
    %1715 = vset.pattern.permute.xlu0 0
    %1716 = vperm.xlu0 %1715, %v57
    %v1717 = vpop.permute.xlu0 %1716
    %1720 = vset.pattern.permute.xlu0 0
    %1721 = vperm.xlu0 %1720, %v58
    %v1722 = vpop.permute.xlu0 %1721
    %v1728 = vunpack.c.l.b16 %v33
    %v1729 = vunpack.c.l.b16 %v34
    %v1730 = vunpack.c.l.b16 %v35
    %v1731 = vunpack.c.l.b16 %v36
    %v1732 = vpack.c.b16 %v1729, %v1728
    %v1733 = vpack.c.b16 %v1731, %v1730
    %vm1734 = vcmask 523264
    %v1736 = vsel %vm1734, %v1732, 0
    %v1739 = vsel %vm1734, %v1733, 0
    %1741 = vmatprep.subr.bf16.mxu0 0
    %1742 = vmatpush1.bf16.msra.mxu0 %v1700
    %1743 = vmatprep.subr.bf16.mxu0 0
    %1744 = vmatpush1.bf16.msra.mxu0 %v1701
    %1745 = vmatprep.subr.bf16.mxu0 0
    %1746 = vmatpush1.bf16.msra.mxu0 %v1702
    %1747 = vmatprep.subr.bf16.mxu0 0
    %1748 = vmatpush1.bf16.msra.mxu0 %v1703
    %1749 = vmatprep.subr.bf16.mxu0 0
    %1750 = vmatpush1.bf16.msra.mxu0 0
    %1751 = vmatprep.subr.bf16.mxu0 0
    %1752 = vmatpush1.bf16.msra.mxu0 0
    %1753 = vmatprep.subr.bf16.mxu0 0
    %1754 = vmatpush1.bf16.msra.mxu0 0
    %1755 = vmatprep.subr.bf16.mxu0 0
    %1756 = vmatpush1.bf16.msra.mxu0 0
    %1757 = vmatprep.subr.bf16.mxu0 0
    %1758 = vmatpush1.bf16.msra.mxu0 0
    %1759 = vmatprep.subr.bf16.mxu0 0
    %1760 = vmatpush1.bf16.msra.mxu0 0
    %1761 = vmatprep.subr.bf16.mxu0 0
    %1762 = vmatpush1.bf16.msra.mxu0 0
    %1763 = vmatprep.subr.bf16.mxu0 0
    %1764 = vmatpush1.bf16.msra.mxu0 0
    %1765 = vmatprep.subr.bf16.mxu0 0
    %1766 = vmatpush1.bf16.msra.mxu0 0
    %1767 = vmatprep.subr.bf16.mxu0 0
    %1768 = vmatpush1.bf16.msra.mxu0 0
    %1769 = vmatprep.subr.bf16.mxu0 0
    %1770 = vmatpush1.bf16.msra.mxu0 0
    %1771 = vmatprep.subr.bf16.mxu0 0
    %1772 = vmatpush1.bf16.msra.mxu0 0
    %1773 = vmatprep.mubr.bf16.mxu0 0
    %1774 = vmatmul.mubr.bf16.gmra.mrb[0].mxu0 %v1736
    %v1775 = vpop.f32.mrb[0].mxu0
    %v1776 = vadd.f32 %v1707, %v1775
    %v1777 = vpop.f32.mrb[0].mxu0
    %v1778 = vpop.f32.mrb[0].mxu0
    %v1779 = vadd.f32 %v1712, %v1778
    %v1780 = vpop.f32.mrb[0].mxu0
    %1781 = vmatprep.mubr.bf16.mxu0 0
    %1782 = vmatmul.mubr.bf16.gmra.mrb[0].mxu0 %v1739
    %v1783 = vpop.f32.mrb[0].mxu0
    %v1784 = vadd.f32 %v1717, %v1783
    %v1785 = vpop.f32.mrb[0].mxu0
    %v1786 = vpop.f32.mrb[0].mxu0
    %v1787 = vadd.f32 %v1722, %v1786
    %v1788 = vpop.f32.mrb[0].mxu0
    %1789 = vdwg.mxu0
    %v1790 = vmax.f32 %v1776, 0.0
    %v1791 = vmax.f32 %v1779, 0.0
    %v1792 = vmax.f32 %v1784, 0.0
    %v1793 = vmax.f32 %v1787, 0.0
    %v1794 = vpack.c.bf16 %v1791, %v1790
    %v1795 = vpack.c.bf16 %v1793, %v1792
    %1797 = vset.pattern.permute.xlu0 0
    %1798 = vperm.xlu0 %1797, %v59
    %v1799 = vpop.permute.xlu0 %1798
    %1802 = vset.pattern.permute.xlu0 0
    %1803 = vperm.xlu0 %1802, %v60
    %v1804 = vpop.permute.xlu0 %1803
    %1807 = vset.pattern.permute.xlu0 0
    %1808 = vperm.xlu0 %1807, %v61
    %v1809 = vpop.permute.xlu0 %1808
    %1812 = vset.pattern.permute.xlu0 0
    %1813 = vperm.xlu0 %1812, %v62
    %v1814 = vpop.permute.xlu0 %1813
    %v1820 = vunpack.c.l.b16 %v37
    %v1821 = vunpack.c.l.b16 %v38
    %v1822 = vunpack.c.l.b16 %v39
    %v1823 = vunpack.c.l.b16 %v40
    %v1824 = vpack.c.b16 %v1821, %v1820
    %v1825 = vpack.c.b16 %v1823, %v1822
    %v1827 = vsel %vm290, %v1824, 0
    %v1830 = vsel %vm290, %v1825, 0
    %1832 = vmatprep.subr.bf16.mxu0 0
    %1833 = vmatpush1.bf16.msra.mxu0 %v1794
    %1834 = vmatprep.subr.bf16.mxu0 0
    %1835 = vmatpush1.bf16.msra.mxu0 %v1795
    %1836 = vmatprep.subr.bf16.mxu0 0
    %1837 = vmatpush1.bf16.msra.mxu0 0
    %1838 = vmatprep.subr.bf16.mxu0 0
    %1839 = vmatpush1.bf16.msra.mxu0 0
    %1840 = vmatprep.subr.bf16.mxu0 0
    %1841 = vmatpush1.bf16.msra.mxu0 0
    %1842 = vmatprep.subr.bf16.mxu0 0
    %1843 = vmatpush1.bf16.msra.mxu0 0
    %1844 = vmatprep.subr.bf16.mxu0 0
    %1845 = vmatpush1.bf16.msra.mxu0 0
    %1846 = vmatprep.subr.bf16.mxu0 0
    %1847 = vmatpush1.bf16.msra.mxu0 0
    %1848 = vmatprep.subr.bf16.mxu0 0
    %1849 = vmatpush1.bf16.msra.mxu0 0
    %1850 = vmatprep.subr.bf16.mxu0 0
    %1851 = vmatpush1.bf16.msra.mxu0 0
    %1852 = vmatprep.subr.bf16.mxu0 0
    %1853 = vmatpush1.bf16.msra.mxu0 0
    %1854 = vmatprep.subr.bf16.mxu0 0
    %1855 = vmatpush1.bf16.msra.mxu0 0
    %1856 = vmatprep.subr.bf16.mxu0 0
    %1857 = vmatpush1.bf16.msra.mxu0 0
    %1858 = vmatprep.subr.bf16.mxu0 0
    %1859 = vmatpush1.bf16.msra.mxu0 0
    %1860 = vmatprep.subr.bf16.mxu0 0
    %1861 = vmatpush1.bf16.msra.mxu0 0
    %1862 = vmatprep.subr.bf16.mxu0 0
    %1863 = vmatpush1.bf16.msra.mxu0 0
    %1864 = vmatprep.mubr.bf16.mxu0 0
    %1865 = vmatmul.mubr.bf16.gmra.mrb[0].mxu0 %v1827
    %v1866 = vpop.f32.mrb[0].mxu0
    %v1867 = vadd.f32 %v1799, %v1866
    %v1868 = vpop.f32.mrb[0].mxu0
    %v1869 = vpop.f32.mrb[0].mxu0
    %v1870 = vadd.f32 %v1804, %v1869
    %v1871 = vpop.f32.mrb[0].mxu0
    %1872 = vmatprep.mubr.bf16.mxu0 0
    %1873 = vmatmul.mubr.bf16.gmra.mrb[0].mxu0 %v1830
    %v1874 = vpop.f32.mrb[0].mxu0
    %v1875 = vadd.f32 %v1809, %v1874
    %v1876 = vpop.f32.mrb[0].mxu0
    %v1877 = vpop.f32.mrb[0].mxu0
    %v1878 = vadd.f32 %v1814, %v1877
    %v1879 = vpop.f32.mrb[0].mxu0
    %1880 = vdwg.mxu0
    %v1881 = vmax.f32 %v1867, 0.0
    %v1882 = vmax.f32 %v1870, 0.0
    %v1883 = vmax.f32 %v1875, 0.0
    %v1884 = vmax.f32 %v1878, 0.0
    %1886 = vset.pattern.permute.xlu0 0
    %1887 = vperm.xlu0 %1886, %v63
    %v1888 = vpop.permute.xlu0 %1887
    %1891 = vset.pattern.permute.xlu0 0
    %1892 = vperm.xlu0 %1891, %v64
    %v1893 = vpop.permute.xlu0 %1892
    %1896 = vset.pattern.permute.xlu0 0
    %1897 = vperm.xlu0 %1896, %v65
    %v1898 = vpop.permute.xlu0 %1897
    %1901 = vset.pattern.permute.xlu0 0
    %1902 = vperm.xlu0 %1901, %v66
    %v1903 = vpop.permute.xlu0 %1902
    %v1905 = vmul.f32 %v1881, %v1888
    %v1906 = vmul.f32 %v1882, %v1893
    %v1907 = vmul.f32 %v1883, %v1898
    %v1908 = vmul.f32 %v1884, %v1903
    %v1909 = vadd.f32 %v1905, %v1906
    %v1910 = vadd.f32 %v1909, %v1907
    %v1911 = vadd.f32 %v1910, %v1908
    %v1912 = vrot.slane %v1911, 4
    %v1913 = vadd.f32 %v1911, %v1912
    %v1914 = vrot.slane %v1913, 2
    %v1915 = vadd.f32 %v1913, %v1914
    %v1916 = vrot.slane %v1915, 1
    %v1917 = vadd.f32 %v1915, %v1916
    %1919 = vset.pattern.permute.xlu0 0
    %1920 = vperm.xlu0 %1919, %v67
    %v1921 = vpop.permute.xlu0 %1920
    %v1923 = vadd.f32 %v1917, %v1921
    %v1924 = vtanh.pop %v1923
    %v1925 = vmul.f32 %v1924, 6.2831855
    %v1926 = vand.u32 2147483647, %v1925
    %vm1927 = vcmp.le.f32.partialorder %v1926, 0.7853982
    %vm1928 = vcmp.lt.s32.totalorder %v1925, 0
    %v1929 = vand.u32 %v1925, 2139095040
    %v1930 = vshrl.u32 %v1929, 23
    %v1931 = vsub.s32 %v1930, 127
    %v1932 = vand.u32 2147483647, %v1925
    %v1933 = vand.u32 %v1932, 8388607
    %v1934 = vor.u32 %v1933, 8388608
    %v1935 = vsub.s32 0, %v1934
    %v1936 = vadd.s32 %v1931, 1
    %vm1937 = vcmp.gt.s32.totalorder %v1936, 0
    %v1938 = vsel %vm1937, %v1936, 0
    %v1939 = vshrl.u32 %v1938, 5
    %v1940 = vand.u32 %v1938, 31
    %v1941 = vsub.s32 32, %v1940
    %v1942 = vshrl.u32 683565275, %v1941
    %v1943 = vshll.u32 683565275, %v1940
    %v1944 = vshrl.u32 2475754826, %v1941
    %v1945 = vor.u32 %v1943, %v1944
    %v1946 = vshll.u32 2475754826, %v1940
    %v1947 = vshrl.u32 2131351028, %v1941
    %v1948 = vor.u32 %v1946, %v1947
    %v1949 = vshll.u32 2131351028, %v1940
    %v1950 = vshrl.u32 2102212464, %v1941
    %v1951 = vor.u32 %v1949, %v1950
    %v1952 = vshll.u32 2102212464, %v1940
    %v1953 = vshrl.u32 920167782, %v1941
    %v1954 = vor.u32 %v1952, %v1953
    %v1955 = vshll.u32 920167782, %v1940
    %v1956 = vshrl.u32 1326507024, %v1941
    %v1957 = vor.u32 %v1955, %v1956
    %vm1958 = vcmp.lt.s32.totalorder %v1939, 1
    %vm1959 = vcmp.lt.s32.totalorder %v1939, 2
    %vm1960 = vcmp.lt.s32.totalorder %v1939, 3
    %vm1961 = vcmp.lt.s32.totalorder %v1939, 4
    %v1962 = vsel %vm1958, %v1942, %v1945
    %v1963 = vsel %vm1961, %v1951, 2102212464
    %v1964 = vsel %vm1960, %v1948, %v1963
    %v1965 = vsel %vm1959, %v1962, %v1964
    %v1966 = vsel %vm1958, %v1945, %v1948
    %v1967 = vsel %vm1961, %v1954, 920167782
    %v1968 = vsel %vm1960, %v1951, %v1967
    %v1969 = vsel %vm1959, %v1966, %v1968
    %v1970 = vsel %vm1958, %v1948, %v1951
    %v1971 = vsel %vm1961, %v1957, 1326507024
    %v1972 = vsel %vm1960, %v1954, %v1971
    %v1973 = vsel %vm1959, %v1970, %v1972
    %v1974 = vshll.u32 %v1934, 8
    %v1975 = vmul.u32.u64.compose %v1974, %v1973
    %v1976 = vextract.low.u32 %v1975
    %v1977 = vextract.high.u32 %v1975
    %v1978 = vmul.u32.u64.compose %v1974, %v1969
    %v1979 = vextract.low.u32 %v1978
    %v1980 = vextract.high.u32 %v1978
    %v1981 = vmul.u32 %v1974, %v1965
    %v1982 = vadd.s32 %v1977, %v1979
    %vm1983 = vc.u32 %v1977, %v1979
    %v1984 = vadd.s32 %v1980, 1
    %v1985 = vsel %vm1983, %v1984, %v1980
    %v1986 = vadd.s32 %v1981, %v1985
    %v1987 = vadd.s32 %v1986, 536870912
    %v1988 = vshrl.u32 %v1987, 30
    %v1989 = vshll.u32 %v1988, 30
    %v1990 = vsub.s32 %v1986, %v1989
    %vm1991 = vcmp.lt.s32.totalorder %v1990, 0
    %v1992 = vsub.s32 0, %v1990
    %v1993 = vsel %vm1991, %v1992, %v1990
    %v1994 = vclz %v1993
    %v1995 = vsub.s32 %v1994, 2
    %vm1996 = vcmp.gt.s32.totalorder 0, %v1995
    %v1997 = vsel %vm1996, 0, %v1995
    %v1998 = vsub.s32 32, %v1997
    %v1999 = vshll.u32 %v1990, %v1997
    %v2000 = vshrl.u32 %v1982, %v1998
    %v2001 = vor.u32 %v1999, %v2000
    %v2002 = vsub.s32 4294967266, %v1997
    %v2003 = vadd.s32 %v2002, 127
    %v2004 = vshll.u32 %v2003, 23
    %v2005 = vor.u32 4788187, %v2004
    %v2006 = vand.u32 2147483647, %v2005
    %v2008 = vcvt.s32.f32 %v2001
    %v2009 = vmul.f32 %v2008, %v2006
    %v2010 = vxor.u32 %v2009, 2147483648
    %v2011 = vsel %vm1928, %v2010, %v2009
    %v2012 = vsub.s32 4, %v1988
    %v2013 = vsel %vm1928, %v2012, %v1988
    %v2014 = vsel %vm1927, %v1925, %v2011
    %v2015 = vsel %vm1927, 0, %v2013
    %v2016 = vcosq.f32.pop %v2014
    %v2017 = vsinq.f32.pop %v2014
    %vm2018 = vweird.f32 %v1925
    %v2019 = vand.u32 %v2015, 3
    %vm2020 = vcmp.lt.s32.totalorder %v2019, 2
    %vm2021 = vcmp.eq.s32.totalorder %v2019, 0
    %v2022 = vxor.u32 %v2017, 2147483648
    %v2023 = vsel %vm2021, %v2016, %v2022
    %vm2024 = vcmp.eq.s32.totalorder %v2019, 2
    %v2025 = vxor.u32 %v2016, 2147483648
    %v2026 = vsel %vm2024, %v2025, %v2017
    %v2027 = vsel %vm2020, %v2023, %v2026
    %v2028 = vsel %vm2018, nan, %v2027
    %v2029 = vand.u32 2147483647, %v1925
    %vm2030 = vcmp.le.f32.partialorder %v2029, 0.7853982
    %vm2031 = vcmp.lt.s32.totalorder %v1925, 0
    %v2032 = vand.u32 %v1925, 2139095040
    %v2033 = vshrl.u32 %v2032, 23
    %v2034 = vsub.s32 %v2033, 127
    %v2035 = vand.u32 2147483647, %v1925
    %v2036 = vand.u32 %v2035, 8388607
    %v2037 = vor.u32 %v2036, 8388608
    %v2038 = vsub.s32 0, %v2037
    %v2039 = vadd.s32 %v2034, 1
    %vm2040 = vcmp.gt.s32.totalorder %v2039, 0
    %v2041 = vsel %vm2040, %v2039, 0
    %v2042 = vshrl.u32 %v2041, 5
    %v2043 = vand.u32 %v2041, 31
    %v2044 = vsub.s32 32, %v2043
    %v2045 = vshrl.u32 683565275, %v2044
    %v2046 = vshll.u32 683565275, %v2043
    %v2047 = vshrl.u32 2475754826, %v2044
    %v2048 = vor.u32 %v2046, %v2047
    %v2049 = vshll.u32 2475754826, %v2043
    %v2050 = vshrl.u32 2131351028, %v2044
    %v2051 = vor.u32 %v2049, %v2050
    %v2052 = vshll.u32 2131351028, %v2043
    %v2053 = vshrl.u32 2102212464, %v2044
    %v2054 = vor.u32 %v2052, %v2053
    %v2055 = vshll.u32 2102212464, %v2043
    %v2056 = vshrl.u32 920167782, %v2044
    %v2057 = vor.u32 %v2055, %v2056
    %v2058 = vshll.u32 920167782, %v2043
    %v2059 = vshrl.u32 1326507024, %v2044
    %v2060 = vor.u32 %v2058, %v2059
    %vm2061 = vcmp.lt.s32.totalorder %v2042, 1
    %vm2062 = vcmp.lt.s32.totalorder %v2042, 2
    %vm2063 = vcmp.lt.s32.totalorder %v2042, 3
    %vm2064 = vcmp.lt.s32.totalorder %v2042, 4
    %v2065 = vsel %vm2061, %v2045, %v2048
    %v2066 = vsel %vm2064, %v2054, 2102212464
    %v2067 = vsel %vm2063, %v2051, %v2066
    %v2068 = vsel %vm2062, %v2065, %v2067
    %v2069 = vsel %vm2061, %v2048, %v2051
    %v2070 = vsel %vm2064, %v2057, 920167782
    %v2071 = vsel %vm2063, %v2054, %v2070
    %v2072 = vsel %vm2062, %v2069, %v2071
    %v2073 = vsel %vm2061, %v2051, %v2054
    %v2074 = vsel %vm2064, %v2060, 1326507024
    %v2075 = vsel %vm2063, %v2057, %v2074
    %v2076 = vsel %vm2062, %v2073, %v2075
    %v2077 = vshll.u32 %v2037, 8
    %v2078 = vmul.u32.u64.compose %v2077, %v2076
    %v2079 = vextract.low.u32 %v2078
    %v2080 = vextract.high.u32 %v2078
    %v2081 = vmul.u32.u64.compose %v2077, %v2072
    %v2082 = vextract.low.u32 %v2081
    %v2083 = vextract.high.u32 %v2081
    %v2084 = vmul.u32 %v2077, %v2068
    %v2085 = vadd.s32 %v2080, %v2082
    %vm2086 = vc.u32 %v2080, %v2082
    %v2087 = vadd.s32 %v2083, 1
    %v2088 = vsel %vm2086, %v2087, %v2083
    %v2089 = vadd.s32 %v2084, %v2088
    %v2090 = vadd.s32 %v2089, 536870912
    %v2091 = vshrl.u32 %v2090, 30
    %v2092 = vshll.u32 %v2091, 30
    %v2093 = vsub.s32 %v2089, %v2092
    %vm2094 = vcmp.lt.s32.totalorder %v2093, 0
    %v2095 = vsub.s32 0, %v2093
    %v2096 = vsel %vm2094, %v2095, %v2093
    %v2097 = vclz %v2096
    %v2098 = vsub.s32 %v2097, 2
    %vm2099 = vcmp.gt.s32.totalorder 0, %v2098
    %v2100 = vsel %vm2099, 0, %v2098
    %v2101 = vsub.s32 32, %v2100
    %v2102 = vshll.u32 %v2093, %v2100
    %v2103 = vshrl.u32 %v2085, %v2101
    %v2104 = vor.u32 %v2102, %v2103
    %v2105 = vsub.s32 4294967266, %v2100
    %v2106 = vadd.s32 %v2105, 127
    %v2107 = vshll.u32 %v2106, 23
    %v2108 = vor.u32 4788187, %v2107
    %v2109 = vand.u32 2147483647, %v2108
    %v2111 = vcvt.s32.f32 %v2104
    %v2112 = vmul.f32 %v2111, %v2109
    %v2113 = vxor.u32 %v2112, 2147483648
    %v2114 = vsel %vm2031, %v2113, %v2112
    %v2115 = vsub.s32 4, %v2091
    %v2116 = vsel %vm2031, %v2115, %v2091
    %v2117 = vsel %vm2030, %v1925, %v2114
    %v2118 = vsel %vm2030, 0, %v2116
    %v2119 = vcosq.f32.pop %v2117
    %v2120 = vsinq.f32.pop %v2117
    %vm2121 = vweird.f32 %v1925
    %v2122 = vadd.s32 %v2118, 3
    %v2123 = vand.u32 %v2122, 3
    %vm2124 = vcmp.lt.s32.totalorder %v2123, 2
    %vm2125 = vcmp.eq.s32.totalorder %v2123, 0
    %v2126 = vxor.u32 %v2120, 2147483648
    %v2127 = vsel %vm2125, %v2119, %v2126
    %vm2128 = vcmp.eq.s32.totalorder %v2123, 2
    %v2129 = vxor.u32 %v2119, 2147483648
    %v2130 = vsel %vm2128, %v2129, %v2120
    %v2131 = vsel %vm2124, %v2127, %v2130
    %v2132 = vsel %vm2121, nan, %v2131
    %v2133 = vld [vmem:[%s1] sm:$0x7]
    %v2134 = vld [vmem:[%s1 + $0x3] sm:$0x7]
    %v2135 = vld [vmem:[%s1 + $0x6] sm:$0x7]
    %v2136 = vlaneseq
    %v2137 = vshrl.u32 %v2136, 7
    %v2138 = vsub.s32 0, %v2137
    %v2139 = vrot.slane %v2028, %v2138
    %v2140 = vmul.f32 %v2139, %v2133
    %v2141 = vlaneseq
    %v2142 = vshrl.u32 %v2141, 7
    %v2143 = vsub.s32 0, %v2142
    %v2144 = vrot.slane %v2132, %v2143
    %v2145 = vmul.f32 %v2144, %v2134
    %v2146 = vadd.f32 %v2140, %v2145
    %2147 = vst [vmem:[#allocation2] sm:$0x7] %v2146
    %v2149 = vrot.slane %v2146, 1
    %v2151 = vmul.f32 %v2135, %v2149
    %v2152 = vrot.slane %v2146, 7
    %v2154 = vmul.f32 %v2135, %v2152
    %v2156 = vrot.slane %v2154, 1
    %v2158 = vsub.f32 %v2151, %v2156
    %2159 = vst [vmem:[#allocation2 + $0x2] sm:$0x2] %v2158
    %v2160 = vrot.slane %v2146, 6
    %v2162 = vmul.f32 %v2135, %v2160
    %v2163 = vrot.slane %v2146, 2
    %v2165 = vmul.f32 %v2135, %v2163
    %v2167 = vrot.slane %v2165, 6
    %v2169 = vsub.f32 %v2162, %v2167
    %2170 = vst [vmem:[#allocation2 + $0x2] sm:$0x4] %v2169
    %2171 = vst [vmem:[#allocation2 + $0x5] sm:$0x1] %v2158
    %2172 = vst [vmem:[#allocation2 + $0x6] sm:$0x3] 0.0
    // Predicated region
    $region18: #{tpu_custom_call.1} parent=1 // pred_check
      _
    $region19: #{tpu_custom_call.1} parent=1 // pred_check_branch
      %2174 = sbr.rel (0) target = $region21
    $region20: #{tpu_custom_call.1} parent=1 // pred_region
      %s2176 = ssub.s32 128, 128
      %2177 = vsyncadd [#allocation3], %s2176
      %s2179 = sshll.u32 [#allocation2], 4
      %s2180 = int_to_ptr.vmem [resolvable:$true] %s2179
      %2182 = dma.vmem_to_hbm [thread:$0]  %s2180, 128, %s4, [#allocation3]
    $region21: #{tpu_custom_call.1} parent=1 // pred_fallthru
      _
    // Predicated region
    $region22: #{tpu_custom_call.1} parent=1 // pred_check
      _
    $region23: #{tpu_custom_call.1} parent=1 // pred_check_branch
      %2184 = sbr.rel (0) target = $region25
    $region24: #{tpu_custom_call.1} parent=1 // pred_region
      %2185 = dma.done [#allocation3], 128
    $region25: #{tpu_custom_call.1} parent=1 // pred_fallthru
      _
    %2186 = vsyncpa [#allocation3], 1

</llo_original>
